<compile_context>
chip_gen: v7x
topology: tpu7x:2x2x1
jax: 0.10.0
libtpu: 0.0.40
codegen_flags: <defaults>
</compile_context>

<pallas_src>
import math
import functools

import jax
import jax.numpy as jnp
from jax.experimental import pallas as pl
from jax.experimental.pallas import tpu as pltpu

# ----------------------------- config (small demo shapes) -----------------------------
N_HEAD = 2                      # rns() broadcast requires exactly 2 heads
HEAD_DIM = 8                    # head_dim = nx // n_head // 2
NX = N_HEAD * 2 * HEAD_DIM      # 32
SEQ = 16
BSZ = 2
LANDMARK = 4
KNN = 4                         # neighbours per row in rns_indices
EPS = 1e-5                      # RMSNorm eps
LAYER = 2                       # "l" argument of forward()
SCALE = True                    # exercise the self.scale branch


# ----------------------------- fused Pallas kernel -----------------------------

def _fused_attention_kernel(scal_ref, x_ref, xl_ref, idx_ref, idxt_ref,
                            wqkv_ref, wc_ref, m1_ref, m2_ref, g_ref, o_ref, *,
                            n_head, head_dim, lane_pack):
    """One batch element per grid step: the entire Attention.forward()."""
    f32 = jnp.float32
    nh = n_head
    hn = 2 * nh
    hd = head_dim
    hd2 = 2 * hd
    nx = hn * hd

    lam = scal_ref[0]            # lambda_full          (scalar, SMEM)
    one_m_lam = scal_ref[1]      # 1 - lambda_full      (scalar, SMEM)

    x = x_ref[0]                 # (T, nx) bf16
    T = x.shape[0]

    # --- fused q|k|v projection: ONE bf16 MXU matmul, f32 accumulation ------------
    qkv = jnp.dot(x, wqkv_ref[...], preferred_element_type=f32)         # (T, 3nx)
    q2 = qkv[:, :nx]
    k2 = qkv[:, nx:2 * nx]
    v2 = qkv[:, 2 * nx:]

    # --- landmark rows: project the host-gathered x rows directly -----------------
    # (replaces the one-hot selector matmul whose contraction scaled with T)
    s_qk = jnp.dot(xl_ref[0], wqkv_ref[:, :2 * nx], preferred_element_type=f32)  # (L, 2nx)
    sq2 = s_qk[:, :nx]
    sk2 = s_qk[:, nx:]

    # --- rns mask: boolean, built once (hoisted). mask^T comes from the host-
    # transposed index copy so no in-kernel (T, T) transpose is needed. ------------
    idx = idx_ref[0]             # (T, KNN) int32
    idxt = idxt_ref[0]           # (KNN, T) int32
    col = jax.lax.broadcasted_iota(jnp.int32, (T, T), 1)
    row = jax.lax.broadcasted_iota(jnp.int32, (T, T), 0)
    mask = idx[:, 0:1] == col
    mask_t = idxt[0:1, :] == row
    for kk in range(1, idx.shape[1]):
        mask = jnp.logical_or(mask, idx[:, kk:kk + 1] == col)
        mask_t = jnp.logical_or(mask_t, idxt[kk:kk + 1, :] == row)
    msym = jnp.logical_and(mask, mask_t)                                 # (T, T) bool

    neg_inf = f32(-1e9)

    # --- per-sub-head scores + masked softmax: all 2-D, head = static lane slice ---
    probs = []
    for h in range(hn):
        sl = slice(h * hd, (h + 1) * hd)
        qh, kh = q2[:, sl], k2[:, sl]
        sqh, skh = sq2[:, sl], sk2[:, sl]
        # L2-normalize landmark rows (rsqrt -> EUP), apply mixers m1/m2.
        # `scaling` is pre-folded into m2 on the host (scales w1, hence w).
        sqh = sqh * jax.lax.rsqrt(jnp.sum(sqh * sqh, -1, keepdims=True) + 1e-12) * m1_ref[h]
        skh = skh * jax.lax.rsqrt(jnp.sum(skh * skh, -1, keepdims=True) + 1e-12) * m2_ref[h]
        w1 = jnp.einsum('td,ld->tl', qh, skh, preferred_element_type=f32)    # (T, L)
        w2 = jnp.einsum('ld,td->lt', sqh, kh, preferred_element_type=f32)    # (L, T)
        w = jnp.einsum('tl,ls->ts', w1, w2, preferred_element_type=f32)      # (T, T)
        # mask + softmax (max-sub; reciprocal on the EUP).  Fully-masked rows follow
        # the reference's -1e9 convention (uniform row), intended behavior.
        w = jnp.where(msym, w, neg_inf)
        w = jnp.exp(w - jnp.max(w, -1, keepdims=True))
        probs.append(w * pl.reciprocal(jnp.sum(w, -1, keepdims=True), approx=True))

    # --- differential combine (PyTorch broadcast quirk => n_head == 2), attn @ V,
    #     RMSNorm(2*hd).  (1 - lambda_init) is pre-folded into g on the host. -------
    ys = []
    for i in range(nh):
        wf = probs[2 * i] - lam * probs[2 * i + 1] + one_m_lam * probs[2 + i] - probs[i]
        a_v = jnp.dot(wf, v2[:, i * hd2:(i + 1) * hd2],
                      preferred_element_type=f32)                        # (T, 2hd)
        var = jnp.mean(a_v * a_v, -1, keepdims=True)
        ys.append(a_v * jax.lax.rsqrt(var + EPS) * g_ref[...])

    # --- merge heads once (single lane-concat) + ONE (T,nx)@(nx,nx) output matmul --
    y = jnp.concatenate(ys, axis=-1).astype(jnp.bfloat16)                # (T, nx)
    out = jnp.dot(y, wc_ref[...], preferred_element_type=f32)            # (T, nx)

    # --- lane-dense store: pack `lane_pack` contiguous row-blocks side by side so
    # the stored last dim is a multiple of 128 (unmasked vst); wrapper un-packs. ----
    if lane_pack > 1:
        rows = T // lane_pack
        out = jnp.concatenate(
            [out[i * rows:(i + 1) * rows, :] for i in range(lane_pack)], axis=1)
    o_ref[0] = out.astype(o_ref.dtype)


# ----------------------------- forward wrapper -----------------------------

def attention_forward(l, x, params, landmark, rns_indices, *, scale=SCALE):
    bsz, T, nx = x.shape
    nh = N_HEAD
    assert nh == 2, "PyTorch rns() broadcast only works with n_head == 2"
    hd = nx // nh // 2
    hn = 2 * nh
    hd2 = 2 * hd
    scaling = float(hd) ** (-0.5)
    L = landmark.shape[0]
    knn = rns_indices.shape[-1]

    # scalars: lambda_init(l) is a static python float; lambda_full is traced
    lambda_init = 0.8 - 0.6 * math.exp(-0.3 * l)
    lam1 = jnp.exp(jnp.sum(params["lambda_q1"] * params["lambda_k1"]))
    lam2 = jnp.exp(jnp.sum(params["lambda_q2"] * params["lambda_k2"]))
    lambda_full = lam1 - lam2 + lambda_init
    scalars = jnp.stack([lambda_full, 1.0 - lambda_full]).astype(jnp.float32)

    # kernel-boundary operands: bf16 activations/weights, fused q|k|v weight,
    # host-gathered landmark rows, host-transposed rns indices, folded constants.
    # TODO(synk): original uses random.sample() per forward; deterministic indices here.
    x_bf = x.astype(jnp.bfloat16)
    x_land = x[:, landmark, :].astype(jnp.bfloat16)                       # (bsz, L, nx)
    rns_t = jnp.transpose(rns_indices, (0, 2, 1))                         # (bsz, knn, T)
    wqkv_t = jnp.concatenate(
        [params["wq"].T, params["wk"].T, params["wv"].T], axis=1).astype(jnp.bfloat16)  # (nx, 3nx)
    wc_t = params["wc"].T.astype(jnp.bfloat16)                            # (nx, nx)
    m1 = params["m1"]                                                     # (hn, L, 1)
    m2_eff = jnp.transpose(params["m2"], (0, 2, 1))                       # (hn, L, 1)
    if scale:
        m2_eff = m2_eff * scaling                                         # fold scaling here
    g_eff = params["subln_g"].reshape(1, hd2) * (1.0 - lambda_init)       # fold (1-lambda_init)

    # lane-dense output packing factor (P contiguous row-blocks packed side by side)
    P = 128 // nx if (nx < 128 and 128 % nx == 0 and T % (128 // nx) == 0) else 1

    kernel = functools.partial(_fused_attention_kernel,
                               n_head=nh, head_dim=hd, lane_pack=P)

    out_packed = pl.pallas_call(
        kernel,
        grid=(bsz,),
        in_specs=[
            pl.BlockSpec(memory_space=pltpu.MemorySpace.SMEM),            # [lam, 1-lam]
            pl.BlockSpec((1, T, nx), lambda b: (b, 0, 0)),                # x (bf16)
            pl.BlockSpec((1, L, nx), lambda b: (b, 0, 0)),                # x[:, landmark] (bf16)
            pl.BlockSpec((1, T, knn), lambda b: (b, 0, 0)),               # rns_indices (int32)
            pl.BlockSpec((1, knn, T), lambda b: (b, 0, 0)),               # rns_indices^T (int32)
            pl.BlockSpec((nx, 3 * nx), lambda b: (0, 0)),                 # [Wq|Wk|Wv]^T (bf16)
            pl.BlockSpec((nx, nx), lambda b: (0, 0)),                     # Wc^T (bf16)
            pl.BlockSpec((hn, L, 1), lambda b: (0, 0, 0)),                # m1
            pl.BlockSpec((hn, L, 1), lambda b: (0, 0, 0)),                # m2^T * scaling
            pl.BlockSpec((1, hd2), lambda b: (0, 0)),                     # g * (1-lambda_init)
        ],
        out_specs=pl.BlockSpec((1, T // P, P * nx), lambda b: (b, 0, 0)),
        out_shape=jax.ShapeDtypeStruct((bsz, T // P, P * nx), jnp.float32),
        compiler_params=pltpu.CompilerParams(dimension_semantics=("parallel",)),
    )(scalars, x_bf, x_land, rns_indices, rns_t, wqkv_t, wc_t, m1, m2_eff, g_eff)

    if P > 1:   # un-pack the lane-dense layout: [b, r, i*nx+c] -> row i*(T//P)+r
        out = out_packed.reshape(bsz, T // P, P, nx)
        out = jnp.transpose(out, (0, 2, 1, 3)).reshape(bsz, T, nx)
    else:
        out = out_packed
    return out


# ----------------------------- pure-JAX reference (f32, loose check) -----------------------------

def attention_reference(l, x, params, landmark, rns_indices, *, scale=SCALE):
    bsz, T, nx = x.shape
    nh = N_HEAD
    hd = nx // nh // 2
    hn = 2 * nh
    scaling = float(hd) ** (-0.5)

    q = x @ params["wq"].T
    k = x @ params["wk"].T
    v = x @ params["wv"].T
    query = q.reshape(bsz, T, hn, hd).transpose(0, 2, 1, 3)              # (b,hn,T,hd)
    key = k.reshape(bsz, T, hn, hd).transpose(0, 2, 1, 3)                # (b,hn,T,hd)
    value = v.reshape(bsz, T, nh, 2 * hd).transpose(0, 2, 1, 3)          # (b,nh,T,2hd)

    sq = query[:, :, landmark, :]
    sk = key[:, :, landmark, :]
    sq = sq * jax.lax.rsqrt(jnp.sum(sq * sq, -1, keepdims=True) + 1e-12)
    sk = sk * jax.lax.rsqrt(jnp.sum(sk * sk, -1, keepdims=True) + 1e-12)
    sq = sq * params["m1"][None]
    sk = sk * jnp.transpose(params["m2"], (0, 2, 1))[None]

    w1 = jnp.einsum('bhtd,bhld->bhtl', query, sk)
    w2 = jnp.einsum('bhld,bhtd->bhlt', sq, key)
    w = jnp.einsum('bhtl,bhls->bhts', w1, w2)
    if scale:
        w = w * scaling

    one_hot = jnp.any(
        rns_indices[:, :, :, None] == jnp.arange(T)[None, None, None, :], axis=2
    ).astype(jnp.float32)                                                # (b,T,T)
    msym = one_hot * jnp.transpose(one_hot, (0, 2, 1))
    w = jnp.where(msym[:, None] > 0, w, -1e9)
    w = jax.nn.softmax(w, axis=-1)

    lambda_init = 0.8 - 0.6 * math.exp(-0.3 * l)
    lam = (jnp.exp(jnp.sum(params["lambda_q1"] * params["lambda_k1"]))
           - jnp.exp(jnp.sum(params["lambda_q2"] * params["lambda_k2"])) + lambda_init)
    wr = w.reshape(bsz, nh, 2, T, T)
    wf = (wr[:, :, 0] - lam * wr[:, :, 1]) + ((1 - lam) * wr[:, 1, :] - wr[:, 0, :])

    a_v = jnp.einsum('bhts,bhsd->bhtd', wf, value)
    var = jnp.mean(a_v * a_v, -1, keepdims=True)
    y = a_v * jax.lax.rsqrt(var + EPS) * params["subln_g"]
    y = y * (1 - lambda_init)
    attn = y.transpose(0, 2, 1, 3).reshape(bsz, T, nx)
    return attn @ params["wc"].T


def init_params(key):
    ks = jax.random.split(key, 12)
    hn = 2 * N_HEAD
    kaiming_std = math.sqrt(2.0 / hn)   # kaiming_normal(mode='fan_out') for (hn, L, 1)/(hn, 1, L)
    return {
        "wq": 0.02 * jax.random.normal(ks[0], (NX, NX), jnp.float32),    # nn.Linear weight (out, in)
        "wk": 0.02 * jax.random.normal(ks[1], (NX, NX), jnp.float32),
        "wv": 0.02 * jax.random.normal(ks[2], (NX, NX), jnp.float32),
        "wc": 0.02 * jax.random.normal(ks[3], (NX, NX), jnp.float32),    # c_proj
        "m1": kaiming_std * jax.random.normal(ks[4], (hn, LANDMARK, 1), jnp.float32),
        "m2": kaiming_std * jax.random.normal(ks[5], (hn, 1, LANDMARK), jnp.float32),
        "lambda_q1": 0.1 * jax.random.normal(ks[6], (HEAD_DIM,), jnp.float32),
        "lambda_k1": 0.1 * jax.random.normal(ks[7], (HEAD_DIM,), jnp.float32),
        "lambda_q2": 0.1 * jax.random.normal(ks[8], (HEAD_DIM,), jnp.float32),
        "lambda_k2": 0.1 * jax.random.normal(ks[9], (HEAD_DIM,), jnp.float32),
        "subln_g": jnp.ones((2 * HEAD_DIM,), jnp.float32),               # RMSNorm weight
    }


if __name__ == "__main__":
    root = jax.random.PRNGKey(0)
    k_x, k_rns, k_lm, k_par = jax.random.split(root, 4)

    x = jax.random.normal(k_x, (BSZ, SEQ, NX), jnp.float32)
    rns_indices = jax.random.randint(k_rns, (BSZ, SEQ, KNN), 0, SEQ, dtype=jnp.int32)
    landmark = jax.random.permutation(k_lm, SEQ)[:LANDMARK]              # unique landmark rows
    params = init_params(k_par)

    fwd = jax.jit(attention_forward, static_argnums=(0,))
    out = jax.block_until_ready(fwd(LAYER, x, params, landmark, rns_indices))

    assert out.shape == (BSZ, SEQ, NX) and out.dtype == jnp.float32
    assert bool(jnp.all(jnp.isfinite(out)))

    # loose check vs. f32 reference (kernel runs bf16 operands + approx reciprocal)
    ref = attention_reference(LAYER, x, params, landmark, rns_indices)
    assert bool(jnp.allclose(out, ref, atol=5e-2, rtol=5e-2))

    print("KERNEL_OK")
</pallas_src>

<mosaic_0001>
module attributes {stable_mosaic.version = 11 : i64} {
  func.func @_fused_attention_kernel(%arg0: i32, %arg1: memref<2xf32, #tpu.memory_space<smem>>, %arg2: memref<1x16x32xbf16, #tpu.memory_space<vmem>>, %arg3: memref<1x4x32xbf16, #tpu.memory_space<vmem>>, %arg4: memref<1x16x4xi32, #tpu.memory_space<vmem>>, %arg5: memref<1x4x16xi32, #tpu.memory_space<vmem>>, %arg6: memref<32x96xbf16, #tpu.memory_space<vmem>>, %arg7: memref<32x32xbf16, #tpu.memory_space<vmem>>, %arg8: memref<4x4x1xf32, #tpu.memory_space<vmem>>, %arg9: memref<4x4x1xf32, #tpu.memory_space<vmem>>, %arg10: memref<1x16xf32, #tpu.memory_space<vmem>>, %arg11: memref<1x4x128xf32, #tpu.memory_space<vmem>>) attributes {dimension_semantics = [#tpu.dimension_semantics<parallel>], iteration_bounds = array<i64: 2>, scalar_prefetch = 0 : i64, scratch_operands = 0 : i64, tpu.core_type = #tpu.core_type<tc>, window_params = [{transform_indices = @transform_0, window_bounds = array<i64: 2>}, {transform_indices = @transform_1, window_bounds = array<i64: 1, 16, 32>}, {transform_indices = @transform_2, window_bounds = array<i64: 1, 4, 32>}, {transform_indices = @transform_3, window_bounds = array<i64: 1, 16, 4>}, {transform_indices = @transform_4, window_bounds = array<i64: 1, 4, 16>}, {pipeline_mode = #tpu.pipeline_mode<synchronous>, transform_indices = @transform_5, window_bounds = array<i64: 32, 96>}, {pipeline_mode = #tpu.pipeline_mode<synchronous>, transform_indices = @transform_6, window_bounds = array<i64: 32, 32>}, {pipeline_mode = #tpu.pipeline_mode<synchronous>, transform_indices = @transform_7, window_bounds = array<i64: 4, 4, 1>}, {pipeline_mode = #tpu.pipeline_mode<synchronous>, transform_indices = @transform_8, window_bounds = array<i64: 4, 4, 1>}, {pipeline_mode = #tpu.pipeline_mode<synchronous>, transform_indices = @transform_9, window_bounds = array<i64: 1, 16>}, {transform_indices = @transform_10, window_bounds = array<i64: 1, 4, 128>}]} {
    %c0 = arith.constant 0 : index
    %0 = memref.load %arg1[%c0] : memref<2xf32, #tpu.memory_space<smem>>
    %c1 = arith.constant 1 : index
    %1 = memref.load %arg1[%c1] : memref<2xf32, #tpu.memory_space<smem>>
    %c0_0 = arith.constant 0 : index
    %c0_1 = arith.constant 0 : index
    %c0_2 = arith.constant 0 : index
    %2 = vector.load %arg2[%c0_0, %c0_1, %c0_2] : memref<1x16x32xbf16, #tpu.memory_space<vmem>>, vector<1x16x32xbf16>
    %3 = vector.shape_cast %2 : vector<1x16x32xbf16> to vector<16x32xbf16>
    %c0_3 = arith.constant 0 : index
    %c0_4 = arith.constant 0 : index
    %4 = vector.load %arg6[%c0_3, %c0_4] : memref<32x96xbf16, #tpu.memory_space<vmem>>, vector<32x96xbf16>
    %cst = arith.constant dense<0.000000e+00> : vector<16x96xf32>
    %5 = tpu.matmul %3, %4, %cst {dimension_numbers = #tpu.dot_dimension_numbers<[1], [0], [0], [1], [0, 0, 1, 1], [], []>} : vector<16x32xbf16>, vector<32x96xbf16>, vector<16x96xf32> -> vector<16x96xf32>
    %6 = vector.extract_strided_slice %5 {offsets = [0, 0], sizes = [16, 32], strides = [1, 1]} : vector<16x96xf32> to vector<16x32xf32>
    %7 = vector.extract_strided_slice %5 {offsets = [0, 32], sizes = [16, 32], strides = [1, 1]} : vector<16x96xf32> to vector<16x32xf32>
    %8 = vector.extract_strided_slice %5 {offsets = [0, 64], sizes = [16, 32], strides = [1, 1]} : vector<16x96xf32> to vector<16x32xf32>
    %c0_5 = arith.constant 0 : index
    %c0_6 = arith.constant 0 : index
    %c0_7 = arith.constant 0 : index
    %9 = vector.load %arg3[%c0_5, %c0_6, %c0_7] : memref<1x4x32xbf16, #tpu.memory_space<vmem>>, vector<1x4x32xbf16>
    %10 = vector.shape_cast %9 : vector<1x4x32xbf16> to vector<4x32xbf16>
    %c0_8 = arith.constant 0 : index
    %c0_9 = arith.constant 0 : index
    %11 = vector.load %arg6[%c0_8, %c0_9] : memref<32x96xbf16, #tpu.memory_space<vmem>>, vector<32x64xbf16>
    %cst_10 = arith.constant dense<0.000000e+00> : vector<4x64xf32>
    %12 = tpu.matmul %10, %11, %cst_10 {dimension_numbers = #tpu.dot_dimension_numbers<[1], [0], [0], [1], [0, 0, 1, 1], [], []>} : vector<4x32xbf16>, vector<32x64xbf16>, vector<4x64xf32> -> vector<4x64xf32>
    %13 = vector.extract_strided_slice %12 {offsets = [0, 0], sizes = [4, 32], strides = [1, 1]} : vector<4x64xf32> to vector<4x32xf32>
    %14 = vector.extract_strided_slice %12 {offsets = [0, 32], sizes = [4, 32], strides = [1, 1]} : vector<4x64xf32> to vector<4x32xf32>
    %c0_11 = arith.constant 0 : index
    %c0_12 = arith.constant 0 : index
    %c0_13 = arith.constant 0 : index
    %15 = vector.load %arg4[%c0_11, %c0_12, %c0_13] : memref<1x16x4xi32, #tpu.memory_space<vmem>>, vector<1x16x4xi32>
    %16 = vector.shape_cast %15 : vector<1x16x4xi32> to vector<16x4xi32>
    %c0_14 = arith.constant 0 : index
    %c0_15 = arith.constant 0 : index
    %c0_16 = arith.constant 0 : index
    %17 = vector.load %arg5[%c0_14, %c0_15, %c0_16] : memref<1x4x16xi32, #tpu.memory_space<vmem>>, vector<1x4x16xi32>
    %18 = vector.shape_cast %17 : vector<1x4x16xi32> to vector<4x16xi32>
    %19 = tpu.iota {dimensions = array<i32: 1>} : vector<16x16xi32>
    %20 = tpu.iota {dimensions = array<i32: 0>} : vector<16x16xi32>
    %21 = vector.extract_strided_slice %16 {offsets = [0, 0], sizes = [16, 1], strides = [1, 1]} : vector<16x4xi32> to vector<16x1xi32>
    %22 = vector.broadcast %21 : vector<16x1xi32> to vector<16x16xi32>
    %23 = arith.cmpi eq, %22, %19 : vector<16x16xi32>
    %24 = vector.extract_strided_slice %18 {offsets = [0, 0], sizes = [1, 16], strides = [1, 1]} : vector<4x16xi32> to vector<1x16xi32>
    %25 = vector.broadcast %24 : vector<1x16xi32> to vector<16x16xi32>
    %26 = arith.cmpi eq, %25, %20 : vector<16x16xi32>
    %27 = vector.extract_strided_slice %16 {offsets = [0, 1], sizes = [16, 1], strides = [1, 1]} : vector<16x4xi32> to vector<16x1xi32>
    %28 = vector.broadcast %27 : vector<16x1xi32> to vector<16x16xi32>
    %29 = arith.cmpi eq, %28, %19 : vector<16x16xi32>
    %30 = arith.ori %23, %29 : vector<16x16xi1>
    %31 = vector.extract_strided_slice %18 {offsets = [1, 0], sizes = [1, 16], strides = [1, 1]} : vector<4x16xi32> to vector<1x16xi32>
    %32 = vector.broadcast %31 : vector<1x16xi32> to vector<16x16xi32>
    %33 = arith.cmpi eq, %32, %20 : vector<16x16xi32>
    %34 = arith.ori %26, %33 : vector<16x16xi1>
    %35 = vector.extract_strided_slice %16 {offsets = [0, 2], sizes = [16, 1], strides = [1, 1]} : vector<16x4xi32> to vector<16x1xi32>
    %36 = vector.broadcast %35 : vector<16x1xi32> to vector<16x16xi32>
    %37 = arith.cmpi eq, %36, %19 : vector<16x16xi32>
    %38 = arith.ori %30, %37 : vector<16x16xi1>
    %39 = vector.extract_strided_slice %18 {offsets = [2, 0], sizes = [1, 16], strides = [1, 1]} : vector<4x16xi32> to vector<1x16xi32>
    %40 = vector.broadcast %39 : vector<1x16xi32> to vector<16x16xi32>
    %41 = arith.cmpi eq, %40, %20 : vector<16x16xi32>
    %42 = arith.ori %34, %41 : vector<16x16xi1>
    %43 = vector.extract_strided_slice %16 {offsets = [0, 3], sizes = [16, 1], strides = [1, 1]} : vector<16x4xi32> to vector<16x1xi32>
    %44 = vector.broadcast %43 : vector<16x1xi32> to vector<16x16xi32>
    %45 = arith.cmpi eq, %44, %19 : vector<16x16xi32>
    %46 = arith.ori %38, %45 : vector<16x16xi1>
    %47 = vector.extract_strided_slice %18 {offsets = [3, 0], sizes = [1, 16], strides = [1, 1]} : vector<4x16xi32> to vector<1x16xi32>
    %48 = vector.broadcast %47 : vector<1x16xi32> to vector<16x16xi32>
    %49 = arith.cmpi eq, %48, %20 : vector<16x16xi32>
    %50 = arith.ori %42, %49 : vector<16x16xi1>
    %51 = arith.andi %46, %50 : vector<16x16xi1>
    %52 = vector.extract_strided_slice %6 {offsets = [0, 0], sizes = [16, 8], strides = [1, 1]} : vector<16x32xf32> to vector<16x8xf32>
    %53 = vector.extract_strided_slice %7 {offsets = [0, 0], sizes = [16, 8], strides = [1, 1]} : vector<16x32xf32> to vector<16x8xf32>
    %54 = vector.extract_strided_slice %13 {offsets = [0, 0], sizes = [4, 8], strides = [1, 1]} : vector<4x32xf32> to vector<4x8xf32>
    %55 = vector.extract_strided_slice %14 {offsets = [0, 0], sizes = [4, 8], strides = [1, 1]} : vector<4x32xf32> to vector<4x8xf32>
    %56 = arith.mulf %54, %54 : vector<4x8xf32>
    %cst_17 = arith.constant dense<0.000000e+00> : vector<4xf32>
    %57 = vector.multi_reduction <add>, %56, %cst_17 [1] : vector<4x8xf32> to vector<4xf32>
    %58 = vector.shape_cast %57 : vector<4xf32> to vector<4x1xf32>
    %cst_18 = arith.constant 9.99999996E-13 : f32
    %59 = vector.broadcast %cst_18 : f32 to vector<4x1xf32>
    %60 = arith.addf %58, %59 : vector<4x1xf32>
    %61 = math.rsqrt %60 : vector<4x1xf32>
    %62 = vector.broadcast %61 : vector<4x1xf32> to vector<4x8xf32>
    %63 = arith.mulf %54, %62 : vector<4x8xf32>
    %c0_19 = arith.constant 0 : index
    %c0_20 = arith.constant 0 : index
    %c0_21 = arith.constant 0 : index
    %64 = vector.load %arg8[%c0_19, %c0_20, %c0_21] : memref<4x4x1xf32, #tpu.memory_space<vmem>>, vector<1x4x1xf32>
    %65 = vector.shape_cast %64 : vector<1x4x1xf32> to vector<4x1xf32>
    %66 = vector.broadcast %65 : vector<4x1xf32> to vector<4x8xf32>
    %67 = arith.mulf %63, %66 : vector<4x8xf32>
    %68 = arith.mulf %55, %55 : vector<4x8xf32>
    %cst_22 = arith.constant dense<0.000000e+00> : vector<4xf32>
    %69 = vector.multi_reduction <add>, %68, %cst_22 [1] : vector<4x8xf32> to vector<4xf32>
    %70 = vector.shape_cast %69 : vector<4xf32> to vector<4x1xf32>
    %cst_23 = arith.constant 9.99999996E-13 : f32
    %71 = vector.broadcast %cst_23 : f32 to vector<4x1xf32>
    %72 = arith.addf %70, %71 : vector<4x1xf32>
    %73 = math.rsqrt %72 : vector<4x1xf32>
    %74 = vector.broadcast %73 : vector<4x1xf32> to vector<4x8xf32>
    %75 = arith.mulf %55, %74 : vector<4x8xf32>
    %c0_24 = arith.constant 0 : index
    %c0_25 = arith.constant 0 : index
    %c0_26 = arith.constant 0 : index
    %76 = vector.load %arg9[%c0_24, %c0_25, %c0_26] : memref<4x4x1xf32, #tpu.memory_space<vmem>>, vector<1x4x1xf32>
    %77 = vector.shape_cast %76 : vector<1x4x1xf32> to vector<4x1xf32>
    %78 = vector.broadcast %77 : vector<4x1xf32> to vector<4x8xf32>
    %79 = arith.mulf %75, %78 : vector<4x8xf32>
    "tpu.trace_start"() <{level = 10 : i32, message = "td,ld->tl"}> : () -> ()
    %cst_27 = arith.constant dense<0.000000e+00> : vector<16x4xf32>
    %80 = tpu.matmul %52, %79, %cst_27 {dimension_numbers = #tpu.dot_dimension_numbers<[1], [1], [0], [0], [0, 0, 1, 0], [], []>} : vector<16x8xf32>, vector<4x8xf32>, vector<16x4xf32> -> vector<16x4xf32>
    "tpu.trace_stop"() : () -> ()
    "tpu.trace_start"() <{level = 10 : i32, message = "ld,td->lt"}> : () -> ()
    %cst_28 = arith.constant dense<0.000000e+00> : vector<4x16xf32>
    %81 = tpu.matmul %67, %53, %cst_28 {dimension_numbers = #tpu.dot_dimension_numbers<[1], [1], [0], [0], [0, 0, 1, 0], [], []>} : vector<4x8xf32>, vector<16x8xf32>, vector<4x16xf32> -> vector<4x16xf32>
    "tpu.trace_stop"() : () -> ()
    "tpu.trace_start"() <{level = 10 : i32, message = "tl,ls->ts"}> : () -> ()
    %cst_29 = arith.constant dense<0.000000e+00> : vector<16x16xf32>
    %82 = tpu.matmul %80, %81, %cst_29 {dimension_numbers = #tpu.dot_dimension_numbers<[1], [0], [0], [1], [0, 0, 1, 1], [], []>} : vector<16x4xf32>, vector<4x16xf32>, vector<16x16xf32> -> vector<16x16xf32>
    %cst_30 = arith.constant -1.000000e+09 : f32
    "tpu.trace_stop"() : () -> ()
    %83 = vector.broadcast %cst_30 : f32 to vector<16x16xf32>
    %84 = arith.select %51, %82, %83 : vector<16x16xi1>, vector<16x16xf32>
    %cst_31 = arith.constant dense<0xFF800000> : vector<16xf32>
    %85 = vector.multi_reduction <maximumf>, %84, %cst_31 [1] : vector<16x16xf32> to vector<16xf32>
    %86 = vector.shape_cast %85 : vector<16xf32> to vector<16x1xf32>
    %87 = vector.broadcast %86 : vector<16x1xf32> to vector<16x16xf32>
    %88 = arith.subf %84, %87 : vector<16x16xf32>
    %89 = math.exp %88 : vector<16x16xf32>
    %cst_32 = arith.constant dense<0.000000e+00> : vector<16xf32>
    %90 = vector.multi_reduction <add>, %89, %cst_32 [1] : vector<16x16xf32> to vector<16xf32>
    %91 = vector.shape_cast %90 : vector<16xf32> to vector<16x1xf32>
    %92 = tpu.reciprocal %91 {approx = true} : vector<16x1xf32> -> vector<16x1xf32>
    %93 = vector.broadcast %92 : vector<16x1xf32> to vector<16x16xf32>
    %94 = arith.mulf %89, %93 : vector<16x16xf32>
    %95 = vector.extract_strided_slice %6 {offsets = [0, 8], sizes = [16, 8], strides = [1, 1]} : vector<16x32xf32> to vector<16x8xf32>
    %96 = vector.extract_strided_slice %7 {offsets = [0, 8], sizes = [16, 8], strides = [1, 1]} : vector<16x32xf32> to vector<16x8xf32>
    %97 = vector.extract_strided_slice %13 {offsets = [0, 8], sizes = [4, 8], strides = [1, 1]} : vector<4x32xf32> to vector<4x8xf32>
    %98 = vector.extract_strided_slice %14 {offsets = [0, 8], sizes = [4, 8], strides = [1, 1]} : vector<4x32xf32> to vector<4x8xf32>
    %99 = arith.mulf %97, %97 : vector<4x8xf32>
    %cst_33 = arith.constant dense<0.000000e+00> : vector<4xf32>
    %100 = vector.multi_reduction <add>, %99, %cst_33 [1] : vector<4x8xf32> to vector<4xf32>
    %101 = vector.shape_cast %100 : vector<4xf32> to vector<4x1xf32>
    %cst_34 = arith.constant 9.99999996E-13 : f32
    %102 = vector.broadcast %cst_34 : f32 to vector<4x1xf32>
    %103 = arith.addf %101, %102 : vector<4x1xf32>
    %104 = math.rsqrt %103 : vector<4x1xf32>
    %105 = vector.broadcast %104 : vector<4x1xf32> to vector<4x8xf32>
    %106 = arith.mulf %97, %105 : vector<4x8xf32>
    %c1_35 = arith.constant 1 : index
    %c0_36 = arith.constant 0 : index
    %c0_37 = arith.constant 0 : index
    %107 = vector.load %arg8[%c1_35, %c0_36, %c0_37] : memref<4x4x1xf32, #tpu.memory_space<vmem>>, vector<1x4x1xf32>
    %108 = vector.shape_cast %107 : vector<1x4x1xf32> to vector<4x1xf32>
    %109 = vector.broadcast %108 : vector<4x1xf32> to vector<4x8xf32>
    %110 = arith.mulf %106, %109 : vector<4x8xf32>
    %111 = arith.mulf %98, %98 : vector<4x8xf32>
    %cst_38 = arith.constant dense<0.000000e+00> : vector<4xf32>
    %112 = vector.multi_reduction <add>, %111, %cst_38 [1] : vector<4x8xf32> to vector<4xf32>
    %113 = vector.shape_cast %112 : vector<4xf32> to vector<4x1xf32>
    %cst_39 = arith.constant 9.99999996E-13 : f32
    %114 = vector.broadcast %cst_39 : f32 to vector<4x1xf32>
    %115 = arith.addf %113, %114 : vector<4x1xf32>
    %116 = math.rsqrt %115 : vector<4x1xf32>
    %117 = vector.broadcast %116 : vector<4x1xf32> to vector<4x8xf32>
    %118 = arith.mulf %98, %117 : vector<4x8xf32>
    %c1_40 = arith.constant 1 : index
    %c0_41 = arith.constant 0 : index
    %c0_42 = arith.constant 0 : index
    %119 = vector.load %arg9[%c1_40, %c0_41, %c0_42] : memref<4x4x1xf32, #tpu.memory_space<vmem>>, vector<1x4x1xf32>
    %120 = vector.shape_cast %119 : vector<1x4x1xf32> to vector<4x1xf32>
    %121 = vector.broadcast %120 : vector<4x1xf32> to vector<4x8xf32>
    %122 = arith.mulf %118, %121 : vector<4x8xf32>
    "tpu.trace_start"() <{level = 10 : i32, message = "td,ld->tl"}> : () -> ()
    %cst_43 = arith.constant dense<0.000000e+00> : vector<16x4xf32>
    %123 = tpu.matmul %95, %122, %cst_43 {dimension_numbers = #tpu.dot_dimension_numbers<[1], [1], [0], [0], [0, 0, 1, 0], [], []>} : vector<16x8xf32>, vector<4x8xf32>, vector<16x4xf32> -> vector<16x4xf32>
    "tpu.trace_stop"() : () -> ()
    "tpu.trace_start"() <{level = 10 : i32, message = "ld,td->lt"}> : () -> ()
    %cst_44 = arith.constant dense<0.000000e+00> : vector<4x16xf32>
    %124 = tpu.matmul %110, %96, %cst_44 {dimension_numbers = #tpu.dot_dimension_numbers<[1], [1], [0], [0], [0, 0, 1, 0], [], []>} : vector<4x8xf32>, vector<16x8xf32>, vector<4x16xf32> -> vector<4x16xf32>
    "tpu.trace_stop"() : () -> ()
    "tpu.trace_start"() <{level = 10 : i32, message = "tl,ls->ts"}> : () -> ()
    %cst_45 = arith.constant dense<0.000000e+00> : vector<16x16xf32>
    %125 = tpu.matmul %123, %124, %cst_45 {dimension_numbers = #tpu.dot_dimension_numbers<[1], [0], [0], [1], [0, 0, 1, 1], [], []>} : vector<16x4xf32>, vector<4x16xf32>, vector<16x16xf32> -> vector<16x16xf32>
    %cst_46 = arith.constant -1.000000e+09 : f32
    "tpu.trace_stop"() : () -> ()
    %126 = vector.broadcast %cst_46 : f32 to vector<16x16xf32>
    %127 = arith.select %51, %125, %126 : vector<16x16xi1>, vector<16x16xf32>
    %cst_47 = arith.constant dense<0xFF800000> : vector<16xf32>
    %128 = vector.multi_reduction <maximumf>, %127, %cst_47 [1] : vector<16x16xf32> to vector<16xf32>
    %129 = vector.shape_cast %128 : vector<16xf32> to vector<16x1xf32>
    %130 = vector.broadcast %129 : vector<16x1xf32> to vector<16x16xf32>
    %131 = arith.subf %127, %130 : vector<16x16xf32>
    %132 = math.exp %131 : vector<16x16xf32>
    %cst_48 = arith.constant dense<0.000000e+00> : vector<16xf32>
    %133 = vector.multi_reduction <add>, %132, %cst_48 [1] : vector<16x16xf32> to vector<16xf32>
    %134 = vector.shape_cast %133 : vector<16xf32> to vector<16x1xf32>
    %135 = tpu.reciprocal %134 {approx = true} : vector<16x1xf32> -> vector<16x1xf32>
    %136 = vector.broadcast %135 : vector<16x1xf32> to vector<16x16xf32>
    %137 = arith.mulf %132, %136 : vector<16x16xf32>
    %138 = vector.extract_strided_slice %6 {offsets = [0, 16], sizes = [16, 8], strides = [1, 1]} : vector<16x32xf32> to vector<16x8xf32>
    %139 = vector.extract_strided_slice %7 {offsets = [0, 16], sizes = [16, 8], strides = [1, 1]} : vector<16x32xf32> to vector<16x8xf32>
    %140 = vector.extract_strided_slice %13 {offsets = [0, 16], sizes = [4, 8], strides = [1, 1]} : vector<4x32xf32> to vector<4x8xf32>
    %141 = vector.extract_strided_slice %14 {offsets = [0, 16], sizes = [4, 8], strides = [1, 1]} : vector<4x32xf32> to vector<4x8xf32>
    %142 = arith.mulf %140, %140 : vector<4x8xf32>
    %cst_49 = arith.constant dense<0.000000e+00> : vector<4xf32>
    %143 = vector.multi_reduction <add>, %142, %cst_49 [1] : vector<4x8xf32> to vector<4xf32>
    %144 = vector.shape_cast %143 : vector<4xf32> to vector<4x1xf32>
    %cst_50 = arith.constant 9.99999996E-13 : f32
    %145 = vector.broadcast %cst_50 : f32 to vector<4x1xf32>
    %146 = arith.addf %144, %145 : vector<4x1xf32>
    %147 = math.rsqrt %146 : vector<4x1xf32>
    %148 = vector.broadcast %147 : vector<4x1xf32> to vector<4x8xf32>
    %149 = arith.mulf %140, %148 : vector<4x8xf32>
    %c2 = arith.constant 2 : index
    %c0_51 = arith.constant 0 : index
    %c0_52 = arith.constant 0 : index
    %150 = vector.load %arg8[%c2, %c0_51, %c0_52] : memref<4x4x1xf32, #tpu.memory_space<vmem>>, vector<1x4x1xf32>
    %151 = vector.shape_cast %150 : vector<1x4x1xf32> to vector<4x1xf32>
    %152 = vector.broadcast %151 : vector<4x1xf32> to vector<4x8xf32>
    %153 = arith.mulf %149, %152 : vector<4x8xf32>
    %154 = arith.mulf %141, %141 : vector<4x8xf32>
    %cst_53 = arith.constant dense<0.000000e+00> : vector<4xf32>
    %155 = vector.multi_reduction <add>, %154, %cst_53 [1] : vector<4x8xf32> to vector<4xf32>
    %156 = vector.shape_cast %155 : vector<4xf32> to vector<4x1xf32>
    %cst_54 = arith.constant 9.99999996E-13 : f32
    %157 = vector.broadcast %cst_54 : f32 to vector<4x1xf32>
    %158 = arith.addf %156, %157 : vector<4x1xf32>
    %159 = math.rsqrt %158 : vector<4x1xf32>
    %160 = vector.broadcast %159 : vector<4x1xf32> to vector<4x8xf32>
    %161 = arith.mulf %141, %160 : vector<4x8xf32>
    %c2_55 = arith.constant 2 : index
    %c0_56 = arith.constant 0 : index
    %c0_57 = arith.constant 0 : index
    %162 = vector.load %arg9[%c2_55, %c0_56, %c0_57] : memref<4x4x1xf32, #tpu.memory_space<vmem>>, vector<1x4x1xf32>
    %163 = vector.shape_cast %162 : vector<1x4x1xf32> to vector<4x1xf32>
    %164 = vector.broadcast %163 : vector<4x1xf32> to vector<4x8xf32>
    %165 = arith.mulf %161, %164 : vector<4x8xf32>
    "tpu.trace_start"() <{level = 10 : i32, message = "td,ld->tl"}> : () -> ()
    %cst_58 = arith.constant dense<0.000000e+00> : vector<16x4xf32>
    %166 = tpu.matmul %138, %165, %cst_58 {dimension_numbers = #tpu.dot_dimension_numbers<[1], [1], [0], [0], [0, 0, 1, 0], [], []>} : vector<16x8xf32>, vector<4x8xf32>, vector<16x4xf32> -> vector<16x4xf32>
    "tpu.trace_stop"() : () -> ()
    "tpu.trace_start"() <{level = 10 : i32, message = "ld,td->lt"}> : () -> ()
    %cst_59 = arith.constant dense<0.000000e+00> : vector<4x16xf32>
    %167 = tpu.matmul %153, %139, %cst_59 {dimension_numbers = #tpu.dot_dimension_numbers<[1], [1], [0], [0], [0, 0, 1, 0], [], []>} : vector<4x8xf32>, vector<16x8xf32>, vector<4x16xf32> -> vector<4x16xf32>
    "tpu.trace_stop"() : () -> ()
    "tpu.trace_start"() <{level = 10 : i32, message = "tl,ls->ts"}> : () -> ()
    %cst_60 = arith.constant dense<0.000000e+00> : vector<16x16xf32>
    %168 = tpu.matmul %166, %167, %cst_60 {dimension_numbers = #tpu.dot_dimension_numbers<[1], [0], [0], [1], [0, 0, 1, 1], [], []>} : vector<16x4xf32>, vector<4x16xf32>, vector<16x16xf32> -> vector<16x16xf32>
    %cst_61 = arith.constant -1.000000e+09 : f32
    "tpu.trace_stop"() : () -> ()
    %169 = vector.broadcast %cst_61 : f32 to vector<16x16xf32>
    %170 = arith.select %51, %168, %169 : vector<16x16xi1>, vector<16x16xf32>
    %cst_62 = arith.constant dense<0xFF800000> : vector<16xf32>
    %171 = vector.multi_reduction <maximumf>, %170, %cst_62 [1] : vector<16x16xf32> to vector<16xf32>
    %172 = vector.shape_cast %171 : vector<16xf32> to vector<16x1xf32>
    %173 = vector.broadcast %172 : vector<16x1xf32> to vector<16x16xf32>
    %174 = arith.subf %170, %173 : vector<16x16xf32>
    %175 = math.exp %174 : vector<16x16xf32>
    %cst_63 = arith.constant dense<0.000000e+00> : vector<16xf32>
    %176 = vector.multi_reduction <add>, %175, %cst_63 [1] : vector<16x16xf32> to vector<16xf32>
    %177 = vector.shape_cast %176 : vector<16xf32> to vector<16x1xf32>
    %178 = tpu.reciprocal %177 {approx = true} : vector<16x1xf32> -> vector<16x1xf32>
    %179 = vector.broadcast %178 : vector<16x1xf32> to vector<16x16xf32>
    %180 = arith.mulf %175, %179 : vector<16x16xf32>
    %181 = vector.extract_strided_slice %6 {offsets = [0, 24], sizes = [16, 8], strides = [1, 1]} : vector<16x32xf32> to vector<16x8xf32>
    %182 = vector.extract_strided_slice %7 {offsets = [0, 24], sizes = [16, 8], strides = [1, 1]} : vector<16x32xf32> to vector<16x8xf32>
    %183 = vector.extract_strided_slice %13 {offsets = [0, 24], sizes = [4, 8], strides = [1, 1]} : vector<4x32xf32> to vector<4x8xf32>
    %184 = vector.extract_strided_slice %14 {offsets = [0, 24], sizes = [4, 8], strides = [1, 1]} : vector<4x32xf32> to vector<4x8xf32>
    %185 = arith.mulf %183, %183 : vector<4x8xf32>
    %cst_64 = arith.constant dense<0.000000e+00> : vector<4xf32>
    %186 = vector.multi_reduction <add>, %185, %cst_64 [1] : vector<4x8xf32> to vector<4xf32>
    %187 = vector.shape_cast %186 : vector<4xf32> to vector<4x1xf32>
    %cst_65 = arith.constant 9.99999996E-13 : f32
    %188 = vector.broadcast %cst_65 : f32 to vector<4x1xf32>
    %189 = arith.addf %187, %188 : vector<4x1xf32>
    %190 = math.rsqrt %189 : vector<4x1xf32>
    %191 = vector.broadcast %190 : vector<4x1xf32> to vector<4x8xf32>
    %192 = arith.mulf %183, %191 : vector<4x8xf32>
    %c3 = arith.constant 3 : index
    %c0_66 = arith.constant 0 : index
    %c0_67 = arith.constant 0 : index
    %193 = vector.load %arg8[%c3, %c0_66, %c0_67] : memref<4x4x1xf32, #tpu.memory_space<vmem>>, vector<1x4x1xf32>
    %194 = vector.shape_cast %193 : vector<1x4x1xf32> to vector<4x1xf32>
    %195 = vector.broadcast %194 : vector<4x1xf32> to vector<4x8xf32>
    %196 = arith.mulf %192, %195 : vector<4x8xf32>
    %197 = arith.mulf %184, %184 : vector<4x8xf32>
    %cst_68 = arith.constant dense<0.000000e+00> : vector<4xf32>
    %198 = vector.multi_reduction <add>, %197, %cst_68 [1] : vector<4x8xf32> to vector<4xf32>
    %199 = vector.shape_cast %198 : vector<4xf32> to vector<4x1xf32>
    %cst_69 = arith.constant 9.99999996E-13 : f32
    %200 = vector.broadcast %cst_69 : f32 to vector<4x1xf32>
    %201 = arith.addf %199, %200 : vector<4x1xf32>
    %202 = math.rsqrt %201 : vector<4x1xf32>
    %203 = vector.broadcast %202 : vector<4x1xf32> to vector<4x8xf32>
    %204 = arith.mulf %184, %203 : vector<4x8xf32>
    %c3_70 = arith.constant 3 : index
    %c0_71 = arith.constant 0 : index
    %c0_72 = arith.constant 0 : index
    %205 = vector.load %arg9[%c3_70, %c0_71, %c0_72] : memref<4x4x1xf32, #tpu.memory_space<vmem>>, vector<1x4x1xf32>
    %206 = vector.shape_cast %205 : vector<1x4x1xf32> to vector<4x1xf32>
    %207 = vector.broadcast %206 : vector<4x1xf32> to vector<4x8xf32>
    %208 = arith.mulf %204, %207 : vector<4x8xf32>
    "tpu.trace_start"() <{level = 10 : i32, message = "td,ld->tl"}> : () -> ()
    %cst_73 = arith.constant dense<0.000000e+00> : vector<16x4xf32>
    %209 = tpu.matmul %181, %208, %cst_73 {dimension_numbers = #tpu.dot_dimension_numbers<[1], [1], [0], [0], [0, 0, 1, 0], [], []>} : vector<16x8xf32>, vector<4x8xf32>, vector<16x4xf32> -> vector<16x4xf32>
    "tpu.trace_stop"() : () -> ()
    "tpu.trace_start"() <{level = 10 : i32, message = "ld,td->lt"}> : () -> ()
    %cst_74 = arith.constant dense<0.000000e+00> : vector<4x16xf32>
    %210 = tpu.matmul %196, %182, %cst_74 {dimension_numbers = #tpu.dot_dimension_numbers<[1], [1], [0], [0], [0, 0, 1, 0], [], []>} : vector<4x8xf32>, vector<16x8xf32>, vector<4x16xf32> -> vector<4x16xf32>
    "tpu.trace_stop"() : () -> ()
    "tpu.trace_start"() <{level = 10 : i32, message = "tl,ls->ts"}> : () -> ()
    %cst_75 = arith.constant dense<0.000000e+00> : vector<16x16xf32>
    %211 = tpu.matmul %209, %210, %cst_75 {dimension_numbers = #tpu.dot_dimension_numbers<[1], [0], [0], [1], [0, 0, 1, 1], [], []>} : vector<16x4xf32>, vector<4x16xf32>, vector<16x16xf32> -> vector<16x16xf32>
    %cst_76 = arith.constant -1.000000e+09 : f32
    "tpu.trace_stop"() : () -> ()
    %212 = vector.broadcast %cst_76 : f32 to vector<16x16xf32>
    %213 = arith.select %51, %211, %212 : vector<16x16xi1>, vector<16x16xf32>
    %cst_77 = arith.constant dense<0xFF800000> : vector<16xf32>
    %214 = vector.multi_reduction <maximumf>, %213, %cst_77 [1] : vector<16x16xf32> to vector<16xf32>
    %215 = vector.shape_cast %214 : vector<16xf32> to vector<16x1xf32>
    %216 = vector.broadcast %215 : vector<16x1xf32> to vector<16x16xf32>
    %217 = arith.subf %213, %216 : vector<16x16xf32>
    %218 = math.exp %217 : vector<16x16xf32>
    %cst_78 = arith.constant dense<0.000000e+00> : vector<16xf32>
    %219 = vector.multi_reduction <add>, %218, %cst_78 [1] : vector<16x16xf32> to vector<16xf32>
    %220 = vector.shape_cast %219 : vector<16xf32> to vector<16x1xf32>
    %221 = tpu.reciprocal %220 {approx = true} : vector<16x1xf32> -> vector<16x1xf32>
    %222 = vector.broadcast %221 : vector<16x1xf32> to vector<16x16xf32>
    %223 = arith.mulf %218, %222 : vector<16x16xf32>
    %224 = vector.broadcast %0 : f32 to vector<16x16xf32>
    %225 = arith.mulf %224, %137 : vector<16x16xf32>
    %226 = arith.subf %94, %225 : vector<16x16xf32>
    %227 = vector.broadcast %1 : f32 to vector<16x16xf32>
    %228 = arith.mulf %227, %180 : vector<16x16xf32>
    %229 = arith.addf %226, %228 : vector<16x16xf32>
    %230 = arith.subf %229, %94 : vector<16x16xf32>
    %231 = vector.extract_strided_slice %8 {offsets = [0, 0], sizes = [16, 16], strides = [1, 1]} : vector<16x32xf32> to vector<16x16xf32>
    %cst_79 = arith.constant dense<0.000000e+00> : vector<16x16xf32>
    %232 = tpu.matmul %230, %231, %cst_79 {dimension_numbers = #tpu.dot_dimension_numbers<[1], [0], [0], [1], [0, 0, 1, 1], [], []>} : vector<16x16xf32>, vector<16x16xf32>, vector<16x16xf32> -> vector<16x16xf32>
    %233 = arith.mulf %232, %232 : vector<16x16xf32>
    %cst_80 = arith.constant dense<0.000000e+00> : vector<16xf32>
    %234 = vector.multi_reduction <add>, %233, %cst_80 [1] : vector<16x16xf32> to vector<16xf32>
    %235 = vector.shape_cast %234 : vector<16xf32> to vector<16x1xf32>
    %cst_81 = arith.constant 1.600000e+01 : f32
    %236 = vector.broadcast %cst_81 : f32 to vector<16x1xf32>
    %237 = arith.divf %235, %236 : vector<16x1xf32>
    %cst_82 = arith.constant 9.99999974E-6 : f32
    %238 = vector.broadcast %cst_82 : f32 to vector<16x1xf32>
    %239 = arith.addf %237, %238 : vector<16x1xf32>
    %240 = math.rsqrt %239 : vector<16x1xf32>
    %241 = vector.broadcast %240 : vector<16x1xf32> to vector<16x16xf32>
    %242 = arith.mulf %232, %241 : vector<16x16xf32>
    %c0_83 = arith.constant 0 : index
    %c0_84 = arith.constant 0 : index
    %243 = vector.load %arg10[%c0_83, %c0_84] : memref<1x16xf32, #tpu.memory_space<vmem>>, vector<1x16xf32>
    %244 = vector.broadcast %243 : vector<1x16xf32> to vector<16x16xf32>
    %245 = arith.mulf %242, %244 : vector<16x16xf32>
    %246 = vector.broadcast %0 : f32 to vector<16x16xf32>
    %247 = arith.mulf %246, %223 : vector<16x16xf32>
    %248 = arith.subf %180, %247 : vector<16x16xf32>
    %249 = vector.broadcast %1 : f32 to vector<16x16xf32>
    %250 = arith.mulf %249, %223 : vector<16x16xf32>
    %251 = arith.addf %248, %250 : vector<16x16xf32>
    %252 = arith.subf %251, %137 : vector<16x16xf32>
    %253 = vector.extract_strided_slice %8 {offsets = [0, 16], sizes = [16, 16], strides = [1, 1]} : vector<16x32xf32> to vector<16x16xf32>
    %cst_85 = arith.constant dense<0.000000e+00> : vector<16x16xf32>
    %254 = tpu.matmul %252, %253, %cst_85 {dimension_numbers = #tpu.dot_dimension_numbers<[1], [0], [0], [1], [0, 0, 1, 1], [], []>} : vector<16x16xf32>, vector<16x16xf32>, vector<16x16xf32> -> vector<16x16xf32>
    %255 = arith.mulf %254, %254 : vector<16x16xf32>
    %cst_86 = arith.constant dense<0.000000e+00> : vector<16xf32>
    %256 = vector.multi_reduction <add>, %255, %cst_86 [1] : vector<16x16xf32> to vector<16xf32>
    %257 = vector.shape_cast %256 : vector<16xf32> to vector<16x1xf32>
    %cst_87 = arith.constant 1.600000e+01 : f32
    %258 = vector.broadcast %cst_87 : f32 to vector<16x1xf32>
    %259 = arith.divf %257, %258 : vector<16x1xf32>
    %cst_88 = arith.constant 9.99999974E-6 : f32
    %260 = vector.broadcast %cst_88 : f32 to vector<16x1xf32>
    %261 = arith.addf %259, %260 : vector<16x1xf32>
    %262 = math.rsqrt %261 : vector<16x1xf32>
    %263 = vector.broadcast %262 : vector<16x1xf32> to vector<16x16xf32>
    %264 = arith.mulf %254, %263 : vector<16x16xf32>
    %c0_89 = arith.constant 0 : index
    %c0_90 = arith.constant 0 : index
    %265 = vector.load %arg10[%c0_89, %c0_90] : memref<1x16xf32, #tpu.memory_space<vmem>>, vector<1x16xf32>
    %266 = vector.broadcast %265 : vector<1x16xf32> to vector<16x16xf32>
    %267 = arith.mulf %264, %266 : vector<16x16xf32>
    %268 = tpu.concatenate %245, %267 in 1 : vector<16x16xf32>, vector<16x16xf32> -> vector<16x32xf32>
    %269 = arith.truncf %268 : vector<16x32xf32> to vector<16x32xbf16>
    %c0_91 = arith.constant 0 : index
    %c0_92 = arith.constant 0 : index
    %270 = vector.load %arg7[%c0_91, %c0_92] : memref<32x32xbf16, #tpu.memory_space<vmem>>, vector<32x32xbf16>
    %cst_93 = arith.constant dense<0.000000e+00> : vector<16x32xf32>
    %271 = tpu.matmul %269, %270, %cst_93 {dimension_numbers = #tpu.dot_dimension_numbers<[1], [0], [0], [1], [0, 0, 1, 1], [], []>} : vector<16x32xbf16>, vector<32x32xbf16>, vector<16x32xf32> -> vector<16x32xf32>
    %272 = vector.extract_strided_slice %271 {offsets = [0, 0], sizes = [4, 32], strides = [1, 1]} : vector<16x32xf32> to vector<4x32xf32>
    %273 = vector.extract_strided_slice %271 {offsets = [4, 0], sizes = [4, 32], strides = [1, 1]} : vector<16x32xf32> to vector<4x32xf32>
    %274 = vector.extract_strided_slice %271 {offsets = [8, 0], sizes = [4, 32], strides = [1, 1]} : vector<16x32xf32> to vector<4x32xf32>
    %275 = vector.extract_strided_slice %271 {offsets = [12, 0], sizes = [4, 32], strides = [1, 1]} : vector<16x32xf32> to vector<4x32xf32>
    %276 = tpu.concatenate %272, %273, %274, %275 in 1 : vector<4x32xf32>, vector<4x32xf32>, vector<4x32xf32>, vector<4x32xf32> -> vector<4x128xf32>
    %c0_94 = arith.constant 0 : index
    %c0_95 = arith.constant 0 : index
    %c0_96 = arith.constant 0 : index
    %277 = vector.load %arg11[%c0_94, %c0_95, %c0_96] : memref<1x4x128xf32, #tpu.memory_space<vmem>>, vector<1x4x128xf32>
    %278 = vector.shape_cast %277 : vector<1x4x128xf32> to vector<4x128xf32>
    %279 = vector.shape_cast %276 : vector<4x128xf32> to vector<1x4x128xf32>
    tpu.vector_store %arg11[%c0_94, %c0_95, %c0_96], %279 {strides = array<i32>} : memref<1x4x128xf32, #tpu.memory_space<vmem>>, vector<1x4x128xf32>,
    return
  }
  func.func @transform_0(%arg0: i32) -> i32 {
    %c0_i32 = arith.constant 0 : i32
    %c0_i32_0 = arith.constant 0 : i32
    return %c0_i32 : i32
  }
  func.func @transform_1(%arg0: i32) -> (i32, i32, i32) {
    %c0_i32 = arith.constant 0 : i32
    %c0_i32_0 = arith.constant 0 : i32
    %c0_i32_1 = arith.constant 0 : i32
    return %arg0, %c0_i32, %c0_i32_0 : i32, i32, i32
  }
  func.func @transform_2(%arg0: i32) -> (i32, i32, i32) {
    %c0_i32 = arith.constant 0 : i32
    %c0_i32_0 = arith.constant 0 : i32
    %c0_i32_1 = arith.constant 0 : i32
    return %arg0, %c0_i32, %c0_i32_0 : i32, i32, i32
  }
  func.func @transform_3(%arg0: i32) -> (i32, i32, i32) {
    %c0_i32 = arith.constant 0 : i32
    %c0_i32_0 = arith.constant 0 : i32
    %c0_i32_1 = arith.constant 0 : i32
    return %arg0, %c0_i32, %c0_i32_0 : i32, i32, i32
  }
  func.func @transform_4(%arg0: i32) -> (i32, i32, i32) {
    %c0_i32 = arith.constant 0 : i32
    %c0_i32_0 = arith.constant 0 : i32
    %c0_i32_1 = arith.constant 0 : i32
    return %arg0, %c0_i32, %c0_i32_0 : i32, i32, i32
  }
  func.func @transform_5(%arg0: i32) -> (i32, i32) {
    %c0_i32 = arith.constant 0 : i32
    %c0_i32_0 = arith.constant 0 : i32
    %c0_i32_1 = arith.constant 0 : i32
    return %c0_i32, %c0_i32_0 : i32, i32
  }
  func.func @transform_6(%arg0: i32) -> (i32, i32) {
    %c0_i32 = arith.constant 0 : i32
    %c0_i32_0 = arith.constant 0 : i32
    %c0_i32_1 = arith.constant 0 : i32
    return %c0_i32, %c0_i32_0 : i32, i32
  }
  func.func @transform_7(%arg0: i32) -> (i32, i32, i32) {
    %c0_i32 = arith.constant 0 : i32
    %c0_i32_0 = arith.constant 0 : i32
    %c0_i32_1 = arith.constant 0 : i32
    %c0_i32_2 = arith.constant 0 : i32
    return %c0_i32, %c0_i32_0, %c0_i32_1 : i32, i32, i32
  }
  func.func @transform_8(%arg0: i32) -> (i32, i32, i32) {
    %c0_i32 = arith.constant 0 : i32
    %c0_i32_0 = arith.constant 0 : i32
    %c0_i32_1 = arith.constant 0 : i32
    %c0_i32_2 = arith.constant 0 : i32
    return %c0_i32, %c0_i32_0, %c0_i32_1 : i32, i32, i32
  }
  func.func @transform_9(%arg0: i32) -> (i32, i32) {
    %c0_i32 = arith.constant 0 : i32
    %c0_i32_0 = arith.constant 0 : i32
    %c0_i32_1 = arith.constant 0 : i32
    return %c0_i32, %c0_i32_0 : i32, i32
  }
  func.func @transform_10(%arg0: i32) -> (i32, i32, i32) {
    %c0_i32 = arith.constant 0 : i32
    %c0_i32_0 = arith.constant 0 : i32
    %c0_i32_1 = arith.constant 0 : i32
    return %arg0, %c0_i32, %c0_i32_0 : i32, i32, i32
  }
}

</mosaic_0001>

<llo_original>
// kernel: attention_forward.1
$region0: #{attention_forward.1}
  #allocation0 [shape = 'u32[]', space=smem, size = 0x4, offset = 0x4, fixed_abs, tag = 'smem constant byte address 0x4 - core index']
  #allocation1 [shape = 'u32[144,128]{1,0:T(1,128)}', space=vmem, size = 0x12000, scoped, tag = 'internal scratch']
  %s0 = inlined_call_operand.vmem [shape: f32[2], index: 0, kind: input, shape index: {}]
  %s1 = inlined_call_operand.vmem [shape: bf16[2,16,32], index: 1, kind: input, shape index: {}]
  %s2 = inlined_call_operand.vmem [shape: bf16[2,4,32], index: 2, kind: input, shape index: {}]
  %s3 = inlined_call_operand.vmem [shape: s32[2,16,4], index: 3, kind: input, shape index: {}]
  %s4 = inlined_call_operand.vmem [shape: s32[2,4,16], index: 4, kind: input, shape index: {}]
  %s5 = inlined_call_operand.vmem [shape: bf16[32,96], index: 5, kind: input, shape index: {}]
  %s6 = inlined_call_operand.vmem [shape: bf16[32,32], index: 6, kind: input, shape index: {}]
  %s7 = inlined_call_operand.vmem [shape: f32[4,4,1], index: 7, kind: input, shape index: {}]
  %s8 = inlined_call_operand.vmem [shape: f32[4,4,1], index: 8, kind: input, shape index: {}]
  %s9 = inlined_call_operand.vmem [shape: f32[1,16], index: 9, kind: input, shape index: {}]
  %s10 = inlined_call_operand.vmem [shape: f32[2,4,128], index: 10, kind: output, shape index: {}]
  %s11 = sld [smem:[#allocation0]]
  $region77: #{attention_forward.1} parent=0
    _
  %s13 = ssub.s32 1, %s11
  %s14 = scalar_select 0, %s13, %s11
  $region1: #{attention_forward.1} parent=0
    #allocation2 [shape = 'u8[512]{0}', space=smem, size = 0x200, scoped, tag = 'input window, operand 0, single buffered']
    #allocation3 [shape = 's32[2]{0}', space=sflag, size = 0x8, scoped, tag = 'scoped memory for attention_forward.1']
    %15 = vsyncpa [#allocation3], 0
    loop: start=0, step=1, limit=4
    $region2: #{attention_forward.1} parent=1 // loop_pre_header
      _
    $region3: #{attention_forward.1} parent=1 // loop_header
      %s17 = sphi 0, %s21
      %p18 = scmp.ge.s32.totalorder %s17, 4
      %s25 = sphi 0, %s25
      %s27 = sphi 0, %s25
      %s28 = sphi 0, %s27
      %s42 = sphi 0, %s28
      %s48 = sphi 0, %s50
      %s51 = sphi 0, %s48
      %s52 = sphi 0, %s51
      %s68 = sphi 0, %s52
      %s74 = sphi 0, %s76
      %s77 = sphi 0, %s74
      %s78 = sphi 0, %s77
      %s94 = sphi 0, %s78
      %s100 = sphi 0, %s102
      %s103 = sphi 0, %s100
      %s104 = sphi 0, %s103
      %s120 = sphi 0, %s104
      %s126 = sphi 0, %s128
      %s129 = sphi 0, %s126
      %s130 = sphi 0, %s129
      %s146 = sphi 0, %s130
      %s150 = sphi 0, %s150
      %s152 = sphi 0, %s150
      %s153 = sphi 0, %s152
      %s167 = sphi 0, %s153
      %s171 = sphi 0, %s171
      %s173 = sphi 0, %s171
      %s174 = sphi 0, %s173
      %s188 = sphi 0, %s174
      %s192 = sphi 0, %s192
      %s194 = sphi 0, %s192
      %s195 = sphi 0, %s194
      %s209 = sphi 0, %s195
      %s213 = sphi 0, %s213
      %s215 = sphi 0, %s213
      %s216 = sphi 0, %s215
      %s230 = sphi 0, %s216
      %s234 = sphi 0, %s234
      %s236 = sphi 0, %s234
      %s237 = sphi 0, %s236
      %s251 = sphi 0, %s237
      %s257 = sphi 0, %s259
      %s260 = sphi 0, %s257
      %s261 = sphi 0, %s260
      %s277 = sphi 0, %s261
    $region4: #{attention_forward.1} parent=1 // loop_header_branch
      %20 = sbr.rel (%p18) target = $region8
    $region5: #{attention_forward.1} parent=1 // loop_body
      %s22 = ssub.s32 %s17, 1
      %s23 = ssub.s32 %s17, 2
      %s24 = sadd.s32 %s17, 1
      %s26 = sadd.s32 %s25, 1
      %p29 = scmp.eq.s32.totalorder %s17, 1
      %p30 = scmp.ne.s32.totalorder %s25, %s27
      %p31 = scmp.eq.s32.totalorder %s17, 0
      %p32 = por %p30, %p31
      %p33 = scmp.ne.s32.totalorder %s25, %s27
      %p34 = scmp.eq.s32.totalorder %s22, 1
      %p35 = por %p33, %p34
      %p36 = scmp.ne.s32.totalorder %s27, %s28
      %p37 = scmp.eq.s32.totalorder %s22, 0
      %p38 = por %p36, %p37
      %p39 = scmp.ne.s32.totalorder %s27, %s28
      %p40 = scmp.eq.s32.totalorder %s23, 1
      %p41 = por %p39, %p40
      %p43 = scmp.ne.s32.totalorder %s28, %s42
      %p44 = scmp.eq.s32.totalorder %s23, 0
      %p45 = por %p43, %p44
      %s46 = ssub.s32 %s17, %s24
      %p47 = scmp.eq.s32.totalorder %s46, 0
      %s49 = sadd.s32 %s48, 1
      %s50 = scalar_select %p47, %s48, %s49
      %p53 = pneg %p47
      %p54 = scmp.eq.s32.totalorder %s17, 1
      %p55 = por %p53, %p54
      %p56 = scmp.ne.s32.totalorder %s48, %s51
      %p57 = scmp.eq.s32.totalorder %s17, 0
      %p58 = por %p56, %p57
      %p59 = scmp.ne.s32.totalorder %s48, %s51
      %p60 = scmp.eq.s32.totalorder %s22, 1
      %p61 = por %p59, %p60
      %p62 = scmp.ne.s32.totalorder %s51, %s52
      %p63 = scmp.eq.s32.totalorder %s22, 0
      %p64 = por %p62, %p63
      %p65 = scmp.ne.s32.totalorder %s51, %s52
      %p66 = scmp.eq.s32.totalorder %s23, 1
      %p67 = por %p65, %p66
      %p69 = scmp.ne.s32.totalorder %s52, %s68
      %p70 = scmp.eq.s32.totalorder %s23, 0
      %p71 = por %p69, %p70
      %s72 = ssub.s32 %s17, %s24
      %p73 = scmp.eq.s32.totalorder %s72, 0
      %s75 = sadd.s32 %s74, 1
      %s76 = scalar_select %p73, %s74, %s75
      %p79 = pneg %p73
      %p80 = scmp.eq.s32.totalorder %s17, 1
      %p81 = por %p79, %p80
      %p82 = scmp.ne.s32.totalorder %s74, %s77
      %p83 = scmp.eq.s32.totalorder %s17, 0
      %p84 = por %p82, %p83
      %p85 = scmp.ne.s32.totalorder %s74, %s77
      %p86 = scmp.eq.s32.totalorder %s22, 1
      %p87 = por %p85, %p86
      %p88 = scmp.ne.s32.totalorder %s77, %s78
      %p89 = scmp.eq.s32.totalorder %s22, 0
      %p90 = por %p88, %p89
      %p91 = scmp.ne.s32.totalorder %s77, %s78
      %p92 = scmp.eq.s32.totalorder %s23, 1
      %p93 = por %p91, %p92
      %p95 = scmp.ne.s32.totalorder %s78, %s94
      %p96 = scmp.eq.s32.totalorder %s23, 0
      %p97 = por %p95, %p96
      %s98 = ssub.s32 %s17, %s24
      %p99 = scmp.eq.s32.totalorder %s98, 0
      %s101 = sadd.s32 %s100, 1
      %s102 = scalar_select %p99, %s100, %s101
      %p105 = pneg %p99
      %p106 = scmp.eq.s32.totalorder %s17, 1
      %p107 = por %p105, %p106
      %p108 = scmp.ne.s32.totalorder %s100, %s103
      %p109 = scmp.eq.s32.totalorder %s17, 0
      %p110 = por %p108, %p109
      %p111 = scmp.ne.s32.totalorder %s100, %s103
      %p112 = scmp.eq.s32.totalorder %s22, 1
      %p113 = por %p111, %p112
      %p114 = scmp.ne.s32.totalorder %s103, %s104
      %p115 = scmp.eq.s32.totalorder %s22, 0
      %p116 = por %p114, %p115
      %p117 = scmp.ne.s32.totalorder %s103, %s104
      %p118 = scmp.eq.s32.totalorder %s23, 1
      %p119 = por %p117, %p118
      %p121 = scmp.ne.s32.totalorder %s104, %s120
      %p122 = scmp.eq.s32.totalorder %s23, 0
      %p123 = por %p121, %p122
      %s124 = ssub.s32 %s17, %s24
      %p125 = scmp.eq.s32.totalorder %s124, 0
      %s127 = sadd.s32 %s126, 1
      %s128 = scalar_select %p125, %s126, %s127
      %p131 = pneg %p125
      %p132 = scmp.eq.s32.totalorder %s17, 1
      %p133 = por %p131, %p132
      %p134 = scmp.ne.s32.totalorder %s126, %s129
      %p135 = scmp.eq.s32.totalorder %s17, 0
      %p136 = por %p134, %p135
      %p137 = scmp.ne.s32.totalorder %s126, %s129
      %p138 = scmp.eq.s32.totalorder %s22, 1
      %p139 = por %p137, %p138
      %p140 = scmp.ne.s32.totalorder %s129, %s130
      %p141 = scmp.eq.s32.totalorder %s22, 0
      %p142 = por %p140, %p141
      %p143 = scmp.ne.s32.totalorder %s129, %s130
      %p144 = scmp.eq.s32.totalorder %s23, 1
      %p145 = por %p143, %p144
      %p147 = scmp.ne.s32.totalorder %s130, %s146
      %p148 = scmp.eq.s32.totalorder %s23, 0
      %p149 = por %p147, %p148
      %s151 = sadd.s32 %s150, 1
      %p154 = scmp.eq.s32.totalorder %s17, 1
      %p155 = scmp.ne.s32.totalorder %s150, %s152
      %p156 = scmp.eq.s32.totalorder %s17, 0
      %p157 = por %p155, %p156
      %p158 = scmp.ne.s32.totalorder %s150, %s152
      %p159 = scmp.eq.s32.totalorder %s22, 1
      %p160 = por %p158, %p159
      %p161 = scmp.ne.s32.totalorder %s152, %s153
      %p162 = scmp.eq.s32.totalorder %s22, 0
      %p163 = por %p161, %p162
      %p164 = scmp.ne.s32.totalorder %s152, %s153
      %p165 = scmp.eq.s32.totalorder %s23, 1
      %p166 = por %p164, %p165
      %p168 = scmp.ne.s32.totalorder %s153, %s167
      %p169 = scmp.eq.s32.totalorder %s23, 0
      %p170 = por %p168, %p169
      %s172 = sadd.s32 %s171, 1
      %p175 = scmp.eq.s32.totalorder %s17, 1
      %p176 = scmp.ne.s32.totalorder %s171, %s173
      %p177 = scmp.eq.s32.totalorder %s17, 0
      %p178 = por %p176, %p177
      %p179 = scmp.ne.s32.totalorder %s171, %s173
      %p180 = scmp.eq.s32.totalorder %s22, 1
      %p181 = por %p179, %p180
      %p182 = scmp.ne.s32.totalorder %s173, %s174
      %p183 = scmp.eq.s32.totalorder %s22, 0
      %p184 = por %p182, %p183
      %p185 = scmp.ne.s32.totalorder %s173, %s174
      %p186 = scmp.eq.s32.totalorder %s23, 1
      %p187 = por %p185, %p186
      %p189 = scmp.ne.s32.totalorder %s174, %s188
      %p190 = scmp.eq.s32.totalorder %s23, 0
      %p191 = por %p189, %p190
      %s193 = sadd.s32 %s192, 1
      %p196 = scmp.eq.s32.totalorder %s17, 1
      %p197 = scmp.ne.s32.totalorder %s192, %s194
      %p198 = scmp.eq.s32.totalorder %s17, 0
      %p199 = por %p197, %p198
      %p200 = scmp.ne.s32.totalorder %s192, %s194
      %p201 = scmp.eq.s32.totalorder %s22, 1
      %p202 = por %p200, %p201
      %p203 = scmp.ne.s32.totalorder %s194, %s195
      %p204 = scmp.eq.s32.totalorder %s22, 0
      %p205 = por %p203, %p204
      %p206 = scmp.ne.s32.totalorder %s194, %s195
      %p207 = scmp.eq.s32.totalorder %s23, 1
      %p208 = por %p206, %p207
      %p210 = scmp.ne.s32.totalorder %s195, %s209
      %p211 = scmp.eq.s32.totalorder %s23, 0
      %p212 = por %p210, %p211
      %s214 = sadd.s32 %s213, 1
      %p217 = scmp.eq.s32.totalorder %s17, 1
      %p218 = scmp.ne.s32.totalorder %s213, %s215
      %p219 = scmp.eq.s32.totalorder %s17, 0
      %p220 = por %p218, %p219
      %p221 = scmp.ne.s32.totalorder %s213, %s215
      %p222 = scmp.eq.s32.totalorder %s22, 1
      %p223 = por %p221, %p222
      %p224 = scmp.ne.s32.totalorder %s215, %s216
      %p225 = scmp.eq.s32.totalorder %s22, 0
      %p226 = por %p224, %p225
      %p227 = scmp.ne.s32.totalorder %s215, %s216
      %p228 = scmp.eq.s32.totalorder %s23, 1
      %p229 = por %p227, %p228
      %p231 = scmp.ne.s32.totalorder %s216, %s230
      %p232 = scmp.eq.s32.totalorder %s23, 0
      %p233 = por %p231, %p232
      %s235 = sadd.s32 %s234, 1
      %p238 = scmp.eq.s32.totalorder %s17, 1
      %p239 = scmp.ne.s32.totalorder %s234, %s236
      %p240 = scmp.eq.s32.totalorder %s17, 0
      %p241 = por %p239, %p240
      %p242 = scmp.ne.s32.totalorder %s234, %s236
      %p243 = scmp.eq.s32.totalorder %s22, 1
      %p244 = por %p242, %p243
      %p245 = scmp.ne.s32.totalorder %s236, %s237
      %p246 = scmp.eq.s32.totalorder %s22, 0
      %p247 = por %p245, %p246
      %p248 = scmp.ne.s32.totalorder %s236, %s237
      %p249 = scmp.eq.s32.totalorder %s23, 1
      %p250 = por %p248, %p249
      %p252 = scmp.ne.s32.totalorder %s237, %s251
      %p253 = scmp.eq.s32.totalorder %s23, 0
      %p254 = por %p252, %p253
      %s255 = ssub.s32 %s17, %s24
      %p256 = scmp.eq.s32.totalorder %s255, 0
      %s258 = sadd.s32 %s257, 1
      %s259 = scalar_select %p256, %s257, %s258
      %p262 = pneg %p256
      %p263 = scmp.eq.s32.totalorder %s17, 1
      %p264 = por %p262, %p263
      %p265 = scmp.ne.s32.totalorder %s257, %s260
      %p266 = scmp.eq.s32.totalorder %s17, 0
      %p267 = por %p265, %p266
      %p268 = scmp.ne.s32.totalorder %s257, %s260
      %p269 = scmp.eq.s32.totalorder %s22, 1
      %p270 = por %p268, %p269
      %p271 = scmp.ne.s32.totalorder %s260, %s261
      %p272 = scmp.eq.s32.totalorder %s22, 0
      %p273 = por %p271, %p272
      %p274 = scmp.ne.s32.totalorder %s260, %s261
      %p275 = scmp.eq.s32.totalorder %s23, 1
      %p276 = por %p274, %p275
      %p278 = scmp.ne.s32.totalorder %s261, %s277
      %p279 = scmp.eq.s32.totalorder %s23, 0
      %p280 = por %p278, %p279
      %p281 = scmp.le.s32.totalorder 1, %s17
      %p282 = scmp.lt.s32.totalorder %s17, 3
      %p283 = pnand %p281, %p282
      %p284 = pneg %p283
      // Predicated region
      $region9: #{attention_forward.1} parent=5 // pred_check
        _
      $region10: #{attention_forward.1} parent=5 // pred_check_branch
        %286 = sbr.rel (%p283) target = $region12
      $region11: #{attention_forward.1} parent=5 // pred_region
        %s287 = ssub.s32 %s17, 1
        // Predicated region
        $region13: #{attention_forward.1} parent=11 // pred_check
          %p288 = pneg %p38
        $region14: #{attention_forward.1} parent=11 // pred_check_branch
          %290 = sbr.rel (%p288) target = $region16
        $region15: #{attention_forward.1} parent=11 // pred_region
          %s292 = ssub.s32 16, 16
          %293 = vsyncadd [#allocation3], %s292
          %s295 = sshll.u32 %s0, 4
          %s296 = int_to_ptr.vmem [resolvable:$true] %s295
          %298 = dma.vmem_to_smem %s296, 16, [#allocation2], [#allocation3]
        $region16: #{attention_forward.1} parent=11 // pred_fallthru
          _
        // Predicated region
        $region17: #{attention_forward.1} parent=11 // pred_check
          %p299 = pneg %p163
        $region18: #{attention_forward.1} parent=11 // pred_check_branch
          %301 = sbr.rel (%p299) target = $region20
        $region19: #{attention_forward.1} parent=11 // pred_region
          _
        $region20: #{attention_forward.1} parent=11 // pred_fallthru
          _
        // Predicated region
        $region21: #{attention_forward.1} parent=11 // pred_check
          %p302 = pneg %p184
        $region22: #{attention_forward.1} parent=11 // pred_check_branch
          %304 = sbr.rel (%p302) target = $region24
        $region23: #{attention_forward.1} parent=11 // pred_region
          _
        $region24: #{attention_forward.1} parent=11 // pred_fallthru
          _
        // Predicated region
        $region25: #{attention_forward.1} parent=11 // pred_check
          %p305 = pneg %p205
        $region26: #{attention_forward.1} parent=11 // pred_check_branch
          %307 = sbr.rel (%p305) target = $region28
        $region27: #{attention_forward.1} parent=11 // pred_region
          _
        $region28: #{attention_forward.1} parent=11 // pred_fallthru
          _
        // Predicated region
        $region29: #{attention_forward.1} parent=11 // pred_check
          %p308 = pneg %p226
        $region30: #{attention_forward.1} parent=11 // pred_check_branch
          %310 = sbr.rel (%p308) target = $region32
        $region31: #{attention_forward.1} parent=11 // pred_region
          _
        $region32: #{attention_forward.1} parent=11 // pred_fallthru
          _
        // Predicated region
        $region33: #{attention_forward.1} parent=11 // pred_check
          %p311 = pneg %p247
        $region34: #{attention_forward.1} parent=11 // pred_check_branch
          %313 = sbr.rel (%p311) target = $region36
        $region35: #{attention_forward.1} parent=11 // pred_region
          _
        $region36: #{attention_forward.1} parent=11 // pred_fallthru
          _
      $region12: #{attention_forward.1} parent=5 // pred_fallthru
        _
      %p314 = scmp.lt.s32.totalorder %s17, 2
      // Predicated region
      $region37: #{attention_forward.1} parent=5 // pred_check
        %p315 = pneg %p314
      $region38: #{attention_forward.1} parent=5 // pred_check_branch
        %317 = sbr.rel (%p315) target = $region40
      $region39: #{attention_forward.1} parent=5 // pred_region
        // Predicated region
        $region41: #{attention_forward.1} parent=39 // pred_check
          %p318 = pneg %p58
        $region42: #{attention_forward.1} parent=39 // pred_check_branch
          %320 = sbr.rel (%p318) target = $region44
        $region43: #{attention_forward.1} parent=39 // pred_region
          %p321 = scmp.lt.s32.totalorder %s17, 1
          %s322 = scalar_select %p321, %s17, 1
          %s323 = smul.addr %s322, 2
          %s324 = smul.addr %s323, 4
          %s325 = scalar_lea.vmem %s1, %s324
        $region44: #{attention_forward.1} parent=39 // pred_fallthru
          _
        // Predicated region
        $region45: #{attention_forward.1} parent=39 // pred_check
          %p326 = pneg %p84
        $region46: #{attention_forward.1} parent=39 // pred_check_branch
          %328 = sbr.rel (%p326) target = $region48
        $region47: #{attention_forward.1} parent=39 // pred_region
          %p329 = scmp.lt.s32.totalorder %s17, 1
          %s330 = scalar_select %p329, %s17, 1
          %s331 = smul.addr %s330, 2
          %s332 = scalar_lea.vmem %s2, %s331
        $region48: #{attention_forward.1} parent=39 // pred_fallthru
          _
        // Predicated region
        $region49: #{attention_forward.1} parent=39 // pred_check
          %p333 = pneg %p110
        $region50: #{attention_forward.1} parent=39 // pred_check_branch
          %335 = sbr.rel (%p333) target = $region52
        $region51: #{attention_forward.1} parent=39 // pred_region
          %p336 = scmp.lt.s32.totalorder %s17, 1
          %s337 = scalar_select %p336, %s17, 1
          %s338 = smul.addr %s337, 2
          %s339 = smul.addr %s338, 8
          %s340 = scalar_lea.vmem %s3, %s339
        $region52: #{attention_forward.1} parent=39 // pred_fallthru
          _
        // Predicated region
        $region53: #{attention_forward.1} parent=39 // pred_check
          %p341 = pneg %p136
        $region54: #{attention_forward.1} parent=39 // pred_check_branch
          %343 = sbr.rel (%p341) target = $region56
        $region55: #{attention_forward.1} parent=39 // pred_region
          %p344 = scmp.lt.s32.totalorder %s17, 1
          %s345 = scalar_select %p344, %s17, 1
          %s346 = smul.addr %s345, 4
          %s347 = scalar_lea.vmem %s4, %s346
        $region56: #{attention_forward.1} parent=39 // pred_fallthru
          _
      $region40: #{attention_forward.1} parent=5 // pred_fallthru
        _
      %p348 = scmp.le.s32.totalorder 1, %s17
      %p349 = scmp.lt.s32.totalorder %s17, 3
      %p350 = pnand %p348, %p349
      %p351 = pneg %p350
      // Predicated region
      $region57: #{attention_forward.1} parent=5 // pred_check
        _
      $region58: #{attention_forward.1} parent=5 // pred_check_branch
        %353 = sbr.rel (%p350) target = $region60
      $region59: #{attention_forward.1} parent=5 // pred_region
        %s354 = ssub.s32 %s17, 1
        // Predicated region
        $region61: #{attention_forward.1} parent=59 // pred_check
          %p355 = pneg %p38
        $region62: #{attention_forward.1} parent=59 // pred_check_branch
          %357 = sbr.rel (%p355) target = $region64
        $region63: #{attention_forward.1} parent=59 // pred_region
          %358 = dma.done [#allocation3], 16
        $region64: #{attention_forward.1} parent=59 // pred_fallthru
          _
        %359 = sfence
        %p360 = pneg %p38
        %p361 = pneg %p35
        %p362 = scmp.lt.s32.totalorder %s22, 1
        %s363 = scalar_select %p362, %s22, 1
        %s364 = smul.addr %s363, 2
        %s365 = smul.addr %s364, 4
        %s366 = scalar_lea.vmem %s1, %s365
        %p367 = pneg %p64
        %p368 = pneg %p61
        %p369 = scmp.lt.s32.totalorder %s22, 1
        %s370 = scalar_select %p369, %s22, 1
        %s371 = smul.addr %s370, 2
        %s372 = scalar_lea.vmem %s2, %s371
        %p373 = pneg %p90
        %p374 = pneg %p87
        %p375 = scmp.lt.s32.totalorder %s22, 1
        %s376 = scalar_select %p375, %s22, 1
        %s377 = smul.addr %s376, 2
        %s378 = smul.addr %s377, 8
        %s379 = scalar_lea.vmem %s3, %s378
        %p380 = pneg %p116
        %p381 = pneg %p113
        %p382 = scmp.lt.s32.totalorder %s22, 1
        %s383 = scalar_select %p382, %s22, 1
        %s384 = smul.addr %s383, 4
        %s385 = scalar_lea.vmem %s4, %s384
        %p386 = pneg %p142
        %p387 = pneg %p139
        %p388 = pneg %p163
        %p389 = pneg %p160
        %p390 = pneg %p184
        %p391 = pneg %p181
        %p392 = pneg %p205
        %p393 = pneg %p202
        %p394 = pneg %p226
        %p395 = pneg %p223
        %p396 = pneg %p247
        %p397 = pneg %p244
        %p398 = pneg %p273
        %p399 = pneg %p270
        %p400 = scmp.lt.s32.totalorder %s22, 1
        %s401 = scalar_select %p400, %s22, 1
        %s402 = smul.addr %s401, 4
        %s403 = scalar_lea.vmem %s10, %s402
        %p404 = scmp.lt.s32.totalorder %s22, 1
        %s405 = scalar_select %p404, %s22, 1
        %s406 = smul.addr %s405, 2
        %s407 = smul.addr %s406, 4
        %s408 = scalar_lea.vmem %s1, %s407
        %p409 = scmp.lt.s32.totalorder %s22, 1
        %s410 = scalar_select %p409, %s22, 1
        %s411 = smul.addr %s410, 2
        %s412 = scalar_lea.vmem %s2, %s411
        %p413 = scmp.lt.s32.totalorder %s22, 1
        %s414 = scalar_select %p413, %s22, 1
        %s415 = smul.addr %s414, 2
        %s416 = smul.addr %s415, 8
        %s417 = scalar_lea.vmem %s3, %s416
        %p418 = scmp.lt.s32.totalorder %s22, 1
        %s419 = scalar_select %p418, %s22, 1
        %s420 = smul.addr %s419, 4
        %s421 = scalar_lea.vmem %s4, %s420
        %p422 = scmp.lt.s32.totalorder %s22, 1
        %s423 = scalar_select %p422, %s22, 1
        %s424 = smul.addr %s423, 4
        %s425 = scalar_lea.vmem %s10, %s424
        %s427 = sld [smem:[#allocation2]]
        %s428 = sld [smem:[#allocation2 + $0x1]]
        %v429 = vld [vmem:[%s408] sm:$0xf]
        %v430 = vld [vmem:[%s408 + $0x4] sm:$0xf]
        %v431 = vld [vmem:[%s5] sm:$0xf]
        %v432 = vld [vmem:[%s5 + $0x4] sm:$0xf]
        %v433 = vld [vmem:[%s5 + $0x8] sm:$0xf]
        %v434 = vld [vmem:[%s5 + $0xc] sm:$0xf]
        %v437 = vunpack.c.l.b16 %v429
        %v438 = vunpack.c.l.b16 %v430
        %v439 = vpack.c.b16 %v438, %v437
        %v444 = vunpack.c.l.b16 %v431
        %v445 = vunpack.c.l.b16 %v432
        %v446 = vunpack.c.l.b16 %v433
        %v447 = vunpack.c.l.b16 %v434
        %v448 = vpack.c.b16 %v445, %v444
        %v449 = vpack.c.b16 %v447, %v446
        %vm452 = vcmask 261120
        %v454 = vsel %vm452, %v439, 0
        %456 = vmatprep.subr.bf16.mxu0 0
        %457 = vmatpush1.bf16.msra.mxu0 %v448
        %458 = vmatprep.subr.bf16.mxu0 0
        %459 = vmatpush1.bf16.msra.mxu0 %v449
        %460 = vmatprep.subr.bf16.mxu0 0
        %461 = vmatpush1.bf16.msra.mxu0 0
        %462 = vmatprep.subr.bf16.mxu0 0
        %463 = vmatpush1.bf16.msra.mxu0 0
        %464 = vmatprep.subr.bf16.mxu0 0
        %465 = vmatpush1.bf16.msra.mxu0 0
        %466 = vmatprep.subr.bf16.mxu0 0
        %467 = vmatpush1.bf16.msra.mxu0 0
        %468 = vmatprep.subr.bf16.mxu0 0
        %469 = vmatpush1.bf16.msra.mxu0 0
        %470 = vmatprep.subr.bf16.mxu0 0
        %471 = vmatpush1.bf16.msra.mxu0 0
        %472 = vmatprep.subr.bf16.mxu0 0
        %473 = vmatpush1.bf16.msra.mxu0 0
        %474 = vmatprep.subr.bf16.mxu0 0
        %475 = vmatpush1.bf16.msra.mxu0 0
        %476 = vmatprep.subr.bf16.mxu0 0
        %477 = vmatpush1.bf16.msra.mxu0 0
        %478 = vmatprep.subr.bf16.mxu0 0
        %479 = vmatpush1.bf16.msra.mxu0 0
        %480 = vmatprep.subr.bf16.mxu0 0
        %481 = vmatpush1.bf16.msra.mxu0 0
        %482 = vmatprep.subr.bf16.mxu0 0
        %483 = vmatpush1.bf16.msra.mxu0 0
        %484 = vmatprep.subr.bf16.mxu0 0
        %485 = vmatpush1.bf16.msra.mxu0 0
        %486 = vmatprep.subr.bf16.mxu0 0
        %487 = vmatpush1.bf16.msra.mxu0 0
        %488 = vmatprep.mubr.bf16.mxu0 0
        %489 = vmatmul.mubr.bf16.gmra.mrb[0].mxu0 %v454
        %v490 = vpop.f32.mrb[0].mxu0
        %v491 = vadd.f32 0.0, %v490
        %v492 = vpop.f32.mrb[0].mxu0
        %v493 = vpop.f32.mrb[0].mxu0
        %v494 = vadd.f32 0.0, %v493
        %v495 = vpop.f32.mrb[0].mxu0
        %496 = vdwg.mxu0
        %v497 = vld [vmem:[%s412] sm:$0x3]
        %v499 = vsel %vm452, %v497, 0
        %501 = vmatprep.subr.bf16.mxu0 0
        %502 = vmatpush1.bf16.msra.mxu0 %v448
        %503 = vmatprep.subr.bf16.mxu0 0
        %504 = vmatpush1.bf16.msra.mxu0 %v449
        %505 = vmatprep.subr.bf16.mxu0 0
        %506 = vmatpush1.bf16.msra.mxu0 0
        %507 = vmatprep.subr.bf16.mxu0 0
        %508 = vmatpush1.bf16.msra.mxu0 0
        %509 = vmatprep.subr.bf16.mxu0 0
        %510 = vmatpush1.bf16.msra.mxu0 0
        %511 = vmatprep.subr.bf16.mxu0 0
        %512 = vmatpush1.bf16.msra.mxu0 0
        %513 = vmatprep.subr.bf16.mxu0 0
        %514 = vmatpush1.bf16.msra.mxu0 0
        %515 = vmatprep.subr.bf16.mxu0 0
        %516 = vmatpush1.bf16.msra.mxu0 0
        %517 = vmatprep.subr.bf16.mxu0 0
        %518 = vmatpush1.bf16.msra.mxu0 0
        %519 = vmatprep.subr.bf16.mxu0 0
        %520 = vmatpush1.bf16.msra.mxu0 0
        %521 = vmatprep.subr.bf16.mxu0 0
        %522 = vmatpush1.bf16.msra.mxu0 0
        %523 = vmatprep.subr.bf16.mxu0 0
        %524 = vmatpush1.bf16.msra.mxu0 0
        %525 = vmatprep.subr.bf16.mxu0 0
        %526 = vmatpush1.bf16.msra.mxu0 0
        %527 = vmatprep.subr.bf16.mxu0 0
        %528 = vmatpush1.bf16.msra.mxu0 0
        %529 = vmatprep.subr.bf16.mxu0 0
        %530 = vmatpush1.bf16.msra.mxu0 0
        %531 = vmatprep.subr.bf16.mxu0 0
        %532 = vmatpush1.bf16.msra.mxu0 0
        %533 = vmatprep.mubr.bf16.mxu0 0
        %534 = vmatmul.mubr.bf16.gmra.mrb[0].mxu0 %v499
        %v535 = vpop.f32.mrb[0].mxu0
        %v536 = vadd.f32 0.0, %v535
        %v537 = vpop.f32.mrb[0].mxu0
        %v538 = vpop.f32.mrb[0].mxu0
        %v539 = vpop.f32.mrb[0].mxu0
        %540 = vdwg.mxu0
        %v541 = vld [vmem:[%s417] sm:$0xff]
        %v542 = vld [vmem:[%s417 + $0x8] sm:$0xff]
        %v543 = vld [vmem:[%s421] sm:$0xf]
        %v544 = vlaneseq
        %v545 = vand.u32 %v544, 127
        %v546 = vlaneseq
        %v547 = vshrl.u32 %v546, 7
        %v548 = vadd.s32 %v547, 8
        %549 = vset.pattern.permute.xlu0 0
        %550 = vperm.xlu0 %549, %v541
        %v551 = vpop.permute.xlu0 %550
        %552 = vset.pattern.permute.xlu0 0
        %553 = vperm.xlu0 %552, %v542
        %v554 = vpop.permute.xlu0 %553
        %vm555 = vcmp.eq.s32.totalorder %v551, %v545
        %vm556 = vcmp.eq.s32.totalorder %v554, %v545
        %v557 = vlaneseq
        %v558 = vshrl.u32 %v557, 7
        %v559 = vsub.s32 0, %v558
        %v560 = vrot.slane %v543, %v559
        %vm561 = vcmp.eq.s32.totalorder %v560, %v547
        %vm562 = vcmp.eq.s32.totalorder %v560, %v548
        %563 = vset.pattern.permute.xlu0 1
        %564 = vperm.xlu0 %563, %v541
        %v565 = vpop.permute.xlu0 %564
        %566 = vset.pattern.permute.xlu0 1
        %567 = vperm.xlu0 %566, %v542
        %v568 = vpop.permute.xlu0 %567
        %vm569 = vcmp.eq.s32.totalorder %v565, %v545
        %vm570 = vcmp.eq.s32.totalorder %v568, %v545
        %vm571 = vmor %vm555, %vm569
        %vm572 = vmor %vm556, %vm570
        %v573 = vlaneseq
        %v574 = vshrl.u32 %v573, 7
        %v575 = vsub.s32 1, %v574
        %v576 = vrot.slane %v543, %v575
        %vm577 = vcmp.eq.s32.totalorder %v576, %v547
        %vm578 = vcmp.eq.s32.totalorder %v576, %v548
        %vm579 = vmor %vm561, %vm577
        %vm580 = vmor %vm562, %vm578
        %581 = vset.pattern.permute.xlu0 2
        %582 = vperm.xlu0 %581, %v541
        %v583 = vpop.permute.xlu0 %582
        %584 = vset.pattern.permute.xlu0 2
        %585 = vperm.xlu0 %584, %v542
        %v586 = vpop.permute.xlu0 %585
        %vm587 = vcmp.eq.s32.totalorder %v583, %v545
        %vm588 = vcmp.eq.s32.totalorder %v586, %v545
        %vm589 = vmor %vm571, %vm587
        %vm590 = vmor %vm572, %vm588
        %v591 = vlaneseq
        %v592 = vshrl.u32 %v591, 7
        %v593 = vsub.s32 2, %v592
        %v594 = vrot.slane %v543, %v593
        %vm595 = vcmp.eq.s32.totalorder %v594, %v547
        %vm596 = vcmp.eq.s32.totalorder %v594, %v548
        %vm597 = vmor %vm579, %vm595
        %vm598 = vmor %vm580, %vm596
        %599 = vset.pattern.permute.xlu0 3
        %600 = vperm.xlu0 %599, %v541
        %v601 = vpop.permute.xlu0 %600
        %602 = vset.pattern.permute.xlu0 3
        %603 = vperm.xlu0 %602, %v542
        %v604 = vpop.permute.xlu0 %603
        %vm605 = vcmp.eq.s32.totalorder %v601, %v545
        %vm606 = vcmp.eq.s32.totalorder %v604, %v545
        %vm607 = vmor %vm589, %vm605
        %vm608 = vmor %vm590, %vm606
        %v609 = vlaneseq
        %v610 = vshrl.u32 %v609, 7
        %v611 = vsub.s32 3, %v610
        %v612 = vrot.slane %v543, %v611
        %vm613 = vcmp.eq.s32.totalorder %v612, %v547
        %vm614 = vcmp.eq.s32.totalorder %v612, %v548
        %vm615 = vmor %vm597, %vm613
        %vm616 = vmor %vm598, %vm614
        %vm617 = vmand %vm607, %vm615
        %vm618 = vmand %vm608, %vm616
        %v619 = vmul.f32 %v536, %v536
        %vm620 = vcmask 60416
        %v621 = vsel %vm620, %v619, 0.0
        %622 = vadd.xlane.f32.xlu0 %v621
        %v623 = vpop.xlane.xlu0 %622
        %v624 = vadd.f32 %v623, 1e-12
        %v625 = vrsqrt.pop %v624
        %v626 = vmul.f32 %v536, %v625
        %v627 = vld [vmem:[%s7] sm:$0xf]
        %629 = vset.pattern.permute.xlu0 0
        %630 = vperm.xlu0 %629, %v627
        %v631 = vpop.permute.xlu0 %630
        %v633 = vmul.f32 %v626, %v631
        %635 = vrot.lane.b32.xlu0 %v619, 96
        %v636 = vpop.permute.xlu0 %635
        %v638 = vsel %vm620, %v636, 0.0
        %639 = vadd.xlane.f32.xlu0 %v638
        %v640 = vpop.xlane.xlu0 %639
        %v641 = vadd.f32 %v640, 1e-12
        %v642 = vrsqrt.pop %v641
        %v643 = vmul.f32 %v536, %v642
        %v644 = vld [vmem:[%s8] sm:$0xf]
        %646 = vset.pattern.permute.xlu0 0
        %647 = vperm.xlu0 %646, %v644
        %v648 = vpop.permute.xlu0 %647
        %v650 = vmul.f32 %v643, %v648
        %652 = vrot.lane.b32.xlu0 %v650, 96
        %v653 = vpop.permute.xlu0 %652
        %vm654 = vcmask 64512
        %v656 = vsel %vm654, %v491, 0
        %v659 = vsel %vm654, %v494, 0
        %v661 = vsel %vm654, %v653, 0
        %663 = vmatprep.subr.mxu0 0.0
        %664 = vmatpush1.xpose.msra.mxu0 %v661
        %665 = vmatprep.subr.mxu0 0.0
        %666 = vmatpush1.xpose.msra.mxu0 0.0
        %667 = vmatprep.subr.mxu0 0.0
        %668 = vmatpush1.xpose.msra.mxu0 0.0
        %669 = vmatprep.subr.mxu0 0.0
        %670 = vmatpush1.xpose.msra.mxu0 0.0
        %671 = vmatprep.subr.mxu0 0.0
        %672 = vmatpush1.xpose.msra.mxu0 0.0
        %673 = vmatprep.subr.mxu0 0.0
        %674 = vmatpush1.xpose.msra.mxu0 0.0
        %675 = vmatprep.subr.mxu0 0.0
        %676 = vmatpush1.xpose.msra.mxu0 0.0
        %677 = vmatprep.subr.mxu0 0.0
        %678 = vmatpush1.xpose.msra.mxu0 0.0
        %679 = vmatprep.subr.mxu0 0.0
        %680 = vmatpush1.xpose.msra.mxu0 0.0
        %681 = vmatprep.subr.mxu0 0.0
        %682 = vmatpush1.xpose.msra.mxu0 0.0
        %683 = vmatprep.subr.mxu0 0.0
        %684 = vmatpush1.xpose.msra.mxu0 0.0
        %685 = vmatprep.subr.mxu0 0.0
        %686 = vmatpush1.xpose.msra.mxu0 0.0
        %687 = vmatprep.subr.mxu0 0.0
        %688 = vmatpush1.xpose.msra.mxu0 0.0
        %689 = vmatprep.subr.mxu0 0.0
        %690 = vmatpush1.xpose.msra.mxu0 0.0
        %691 = vmatprep.subr.mxu0 0.0
        %692 = vmatpush1.xpose.msra.mxu0 0.0
        %693 = vmatprep.subr.mxu0 0.0
        %694 = vmatpush1.xpose.msra.mxu0 0.0
        %695 = vmatprep.subr.mxu0 0.0
        %696 = vmatpush1.xpose.msra.mxu0 0.0
        %697 = vmatprep.subr.mxu0 0.0
        %698 = vmatpush1.xpose.msra.mxu0 0.0
        %699 = vmatprep.subr.mxu0 0.0
        %700 = vmatpush1.xpose.msra.mxu0 0.0
        %701 = vmatprep.subr.mxu0 0.0
        %702 = vmatpush1.xpose.msra.mxu0 0.0
        %703 = vmatprep.subr.mxu0 0.0
        %704 = vmatpush1.xpose.msra.mxu0 0.0
        %705 = vmatprep.subr.mxu0 0.0
        %706 = vmatpush1.xpose.msra.mxu0 0.0
        %707 = vmatprep.subr.mxu0 0.0
        %708 = vmatpush1.xpose.msra.mxu0 0.0
        %709 = vmatprep.subr.mxu0 0.0
        %710 = vmatpush1.xpose.msra.mxu0 0.0
        %711 = vmatprep.subr.mxu0 0.0
        %712 = vmatpush1.xpose.msra.mxu0 0.0
        %713 = vmatprep.subr.mxu0 0.0
        %714 = vmatpush1.xpose.msra.mxu0 0.0
        %715 = vmatprep.subr.mxu0 0.0
        %716 = vmatpush1.xpose.msra.mxu0 0.0
        %717 = vmatprep.subr.mxu0 0.0
        %718 = vmatpush1.xpose.msra.mxu0 0.0
        %719 = vmatprep.subr.mxu0 0.0
        %720 = vmatpush1.xpose.msra.mxu0 0.0
        %721 = vmatprep.subr.mxu0 0.0
        %722 = vmatpush1.xpose.msra.mxu0 0.0
        %723 = vmatprep.subr.mxu0 0.0
        %724 = vmatpush1.xpose.msra.mxu0 0.0
        %725 = vmatprep.subr.mxu0 0.0
        %726 = vmatpush1.xpose.msra.mxu0 0.0
        %727 = vmatprep.mubr.f32.mxu0 0.0
        %728 = vmatmul.mubr.f32.gmra.mrb[0].mxu0 %v656
        %v729 = vpop.f32.mrb[0].mxu0
        %v730 = vadd.f32 0.0, %v729
        %v731 = vpop.f32.mrb[0].mxu0
        %732 = vmatprep.mubr.f32.mxu0 0.0
        %733 = vmatmul.mubr.f32.gmra.mrb[0].mxu0 %v659
        %v734 = vpop.f32.mrb[0].mxu0
        %v735 = vadd.f32 0.0, %v734
        %v736 = vpop.f32.mrb[0].mxu0
        %737 = vdwg.mxu0
        %738 = vrot.lane.b32.xlu0 %v491, 96
        %v739 = vpop.permute.xlu0 %738
        %740 = vrot.lane.b32.xlu0 %v494, 96
        %v741 = vpop.permute.xlu0 %740
        %v743 = vsel %vm654, %v633, 0
        %v745 = vsel %vm654, %v739, 0
        %v747 = vsel %vm654, %v741, 0
        %749 = vmatprep.subr.mxu0 0.0
        %750 = vmatpush1.xpose.msra.mxu0 %v745
        %751 = vmatprep.subr.mxu0 0.0
        %752 = vmatpush1.xpose.msra.mxu0 %v747
        %753 = vmatprep.subr.mxu0 0.0
        %754 = vmatpush1.xpose.msra.mxu0 0.0
        %755 = vmatprep.subr.mxu0 0.0
        %756 = vmatpush1.xpose.msra.mxu0 0.0
        %757 = vmatprep.subr.mxu0 0.0
        %758 = vmatpush1.xpose.msra.mxu0 0.0
        %759 = vmatprep.subr.mxu0 0.0
        %760 = vmatpush1.xpose.msra.mxu0 0.0
        %761 = vmatprep.subr.mxu0 0.0
        %762 = vmatpush1.xpose.msra.mxu0 0.0
        %763 = vmatprep.subr.mxu0 0.0
        %764 = vmatpush1.xpose.msra.mxu0 0.0
        %765 = vmatprep.subr.mxu0 0.0
        %766 = vmatpush1.xpose.msra.mxu0 0.0
        %767 = vmatprep.subr.mxu0 0.0
        %768 = vmatpush1.xpose.msra.mxu0 0.0
        %769 = vmatprep.subr.mxu0 0.0
        %770 = vmatpush1.xpose.msra.mxu0 0.0
        %771 = vmatprep.subr.mxu0 0.0
        %772 = vmatpush1.xpose.msra.mxu0 0.0
        %773 = vmatprep.subr.mxu0 0.0
        %774 = vmatpush1.xpose.msra.mxu0 0.0
        %775 = vmatprep.subr.mxu0 0.0
        %776 = vmatpush1.xpose.msra.mxu0 0.0
        %777 = vmatprep.subr.mxu0 0.0
        %778 = vmatpush1.xpose.msra.mxu0 0.0
        %779 = vmatprep.subr.mxu0 0.0
        %780 = vmatpush1.xpose.msra.mxu0 0.0
        %781 = vmatprep.subr.mxu0 0.0
        %782 = vmatpush1.xpose.msra.mxu0 0.0
        %783 = vmatprep.subr.mxu0 0.0
        %784 = vmatpush1.xpose.msra.mxu0 0.0
        %785 = vmatprep.subr.mxu0 0.0
        %786 = vmatpush1.xpose.msra.mxu0 0.0
        %787 = vmatprep.subr.mxu0 0.0
        %788 = vmatpush1.xpose.msra.mxu0 0.0
        %789 = vmatprep.subr.mxu0 0.0
        %790 = vmatpush1.xpose.msra.mxu0 0.0
        %791 = vmatprep.subr.mxu0 0.0
        %792 = vmatpush1.xpose.msra.mxu0 0.0
        %793 = vmatprep.subr.mxu0 0.0
        %794 = vmatpush1.xpose.msra.mxu0 0.0
        %795 = vmatprep.subr.mxu0 0.0
        %796 = vmatpush1.xpose.msra.mxu0 0.0
        %797 = vmatprep.subr.mxu0 0.0
        %798 = vmatpush1.xpose.msra.mxu0 0.0
        %799 = vmatprep.subr.mxu0 0.0
        %800 = vmatpush1.xpose.msra.mxu0 0.0
        %801 = vmatprep.subr.mxu0 0.0
        %802 = vmatpush1.xpose.msra.mxu0 0.0
        %803 = vmatprep.subr.mxu0 0.0
        %804 = vmatpush1.xpose.msra.mxu0 0.0
        %805 = vmatprep.subr.mxu0 0.0
        %806 = vmatpush1.xpose.msra.mxu0 0.0
        %807 = vmatprep.subr.mxu0 0.0
        %808 = vmatpush1.xpose.msra.mxu0 0.0
        %809 = vmatprep.subr.mxu0 0.0
        %810 = vmatpush1.xpose.msra.mxu0 0.0
        %811 = vmatprep.subr.mxu0 0.0
        %812 = vmatpush1.xpose.msra.mxu0 0.0
        %813 = vmatprep.mubr.f32.mxu0 0.0
        %814 = vmatmul.mubr.f32.gmra.mrb[0].mxu0 %v743
        %v815 = vpop.f32.mrb[0].mxu0
        %v816 = vadd.f32 0.0, %v815
        %v817 = vpop.f32.mrb[0].mxu0
        %818 = vdwg.mxu0
        %vm819 = vcmask 31744
        %v821 = vsel %vm819, %v730, 0
        %v824 = vsel %vm819, %v735, 0
        %vm826 = vcmask 1043456
        %v828 = vsel %vm826, %v816, 0
        %830 = vmatprep.subr.mxu0 0.0
        %831 = vmatpush1.msra.mxu0 %v828
        %832 = vmatprep.subr.mxu0 0.0
        %833 = vmatpush1.msra.mxu0 0.0
        %834 = vmatprep.subr.mxu0 0.0
        %835 = vmatpush1.msra.mxu0 0.0
        %836 = vmatprep.subr.mxu0 0.0
        %837 = vmatpush1.msra.mxu0 0.0
        %838 = vmatprep.subr.mxu0 0.0
        %839 = vmatpush1.msra.mxu0 0.0
        %840 = vmatprep.subr.mxu0 0.0
        %841 = vmatpush1.msra.mxu0 0.0
        %842 = vmatprep.subr.mxu0 0.0
        %843 = vmatpush1.msra.mxu0 0.0
        %844 = vmatprep.subr.mxu0 0.0
        %845 = vmatpush1.msra.mxu0 0.0
        %846 = vmatprep.subr.mxu0 0.0
        %847 = vmatpush1.msra.mxu0 0.0
        %848 = vmatprep.subr.mxu0 0.0
        %849 = vmatpush1.msra.mxu0 0.0
        %850 = vmatprep.subr.mxu0 0.0
        %851 = vmatpush1.msra.mxu0 0.0
        %852 = vmatprep.subr.mxu0 0.0
        %853 = vmatpush1.msra.mxu0 0.0
        %854 = vmatprep.subr.mxu0 0.0
        %855 = vmatpush1.msra.mxu0 0.0
        %856 = vmatprep.subr.mxu0 0.0
        %857 = vmatpush1.msra.mxu0 0.0
        %858 = vmatprep.subr.mxu0 0.0
        %859 = vmatpush1.msra.mxu0 0.0
        %860 = vmatprep.subr.mxu0 0.0
        %861 = vmatpush1.msra.mxu0 0.0
        %862 = vmatprep.subr.mxu0 0.0
        %863 = vmatpush1.msra.mxu0 0.0
        %864 = vmatprep.subr.mxu0 0.0
        %865 = vmatpush1.msra.mxu0 0.0
        %866 = vmatprep.subr.mxu0 0.0
        %867 = vmatpush1.msra.mxu0 0.0
        %868 = vmatprep.subr.mxu0 0.0
        %869 = vmatpush1.msra.mxu0 0.0
        %870 = vmatprep.subr.mxu0 0.0
        %871 = vmatpush1.msra.mxu0 0.0
        %872 = vmatprep.subr.mxu0 0.0
        %873 = vmatpush1.msra.mxu0 0.0
        %874 = vmatprep.subr.mxu0 0.0
        %875 = vmatpush1.msra.mxu0 0.0
        %876 = vmatprep.subr.mxu0 0.0
        %877 = vmatpush1.msra.mxu0 0.0
        %878 = vmatprep.subr.mxu0 0.0
        %879 = vmatpush1.msra.mxu0 0.0
        %880 = vmatprep.subr.mxu0 0.0
        %881 = vmatpush1.msra.mxu0 0.0
        %882 = vmatprep.subr.mxu0 0.0
        %883 = vmatpush1.msra.mxu0 0.0
        %884 = vmatprep.subr.mxu0 0.0
        %885 = vmatpush1.msra.mxu0 0.0
        %886 = vmatprep.subr.mxu0 0.0
        %887 = vmatpush1.msra.mxu0 0.0
        %888 = vmatprep.subr.mxu0 0.0
        %889 = vmatpush1.msra.mxu0 0.0
        %890 = vmatprep.subr.mxu0 0.0
        %891 = vmatpush1.msra.mxu0 0.0
        %892 = vmatprep.subr.mxu0 0.0
        %893 = vmatpush1.msra.mxu0 0.0
        %894 = vmatprep.mubr.f32.mxu0 0.0
        %895 = vmatmul.mubr.f32.gmra.mrb[0].mxu0 %v821
        %v896 = vpop.f32.mrb[0].mxu0
        %v897 = vadd.f32 0.0, %v896
        %v898 = vpop.f32.mrb[0].mxu0
        %899 = vmatprep.mubr.f32.mxu0 0.0
        %900 = vmatmul.mubr.f32.gmra.mrb[0].mxu0 %v824
        %v901 = vpop.f32.mrb[0].mxu0
        %v902 = vadd.f32 0.0, %v901
        %v903 = vpop.f32.mrb[0].mxu0
        %904 = vdwg.mxu0
        %v905 = vsel %vm617, %v897, -1e+09
        %v906 = vsel %vm618, %v902, -1e+09
        %vm907 = vcmask 130048
        %v908 = vsel %vm907, %v905, -inf
        %909 = vmax.xlane.f32.xlu0 %v908
        %v910 = vpop.xlane.xlu0 %909
        %v911 = vsel %vm907, %v906, -inf
        %912 = vmax.xlane.f32.xlu0 %v911
        %v913 = vpop.xlane.xlu0 %912
        %v914 = vsub.f32 %v905, %v910
        %v915 = vsub.f32 %v906, %v913
        %v916 = vmul.f32 %v914, 1.442695
        %v917 = vpow.pop %v916
        %v918 = vmul.f32 %v915, 1.442695
        %v919 = vpow.pop %v918
        %v920 = vsel %vm907, %v917, 0.0
        %921 = vadd.xlane.f32.xlu0 %v920
        %v922 = vpop.xlane.xlu0 %921
        %v923 = vsel %vm907, %v919, 0.0
        %924 = vadd.xlane.f32.xlu0 %v923
        %v925 = vpop.xlane.xlu0 %924
        %v926 = vrcp.pop %v922
        %v927 = vrcp.pop %v925
        %v928 = vmul.f32 %v917, %v926
        %v929 = vmul.f32 %v919, %v927
        %930 = vrot.lane.b32.xlu0 %v619, 120
        %v931 = vpop.permute.xlu0 %930
        %v933 = vsel %vm620, %v931, 0.0
        %934 = vadd.xlane.f32.xlu0 %v933
        %v935 = vpop.xlane.xlu0 %934
        %v936 = vadd.f32 %v935, 1e-12
        %v937 = vrsqrt.pop %v936
        %v938 = vmul.f32 %v536, %v937
        %s939 = scalar_lea.vmem %s7, 4
        %v940 = vld [vmem:[%s939] sm:$0xf]
        %942 = vset.pattern.permute.xlu0 0
        %943 = vperm.xlu0 %942, %v940
        %v944 = vpop.permute.xlu0 %943
        %v946 = vmul.f32 %v938, %v944
        %947 = vrot.lane.b32.xlu0 %v619, 88
        %v948 = vpop.permute.xlu0 %947
        %v950 = vsel %vm620, %v948, 0.0
        %951 = vadd.xlane.f32.xlu0 %v950
        %v952 = vpop.xlane.xlu0 %951
        %v953 = vadd.f32 %v952, 1e-12
        %v954 = vrsqrt.pop %v953
        %v955 = vmul.f32 %v536, %v954
        %s956 = scalar_lea.vmem %s8, 4
        %v957 = vld [vmem:[%s956] sm:$0xf]
        %959 = vset.pattern.permute.xlu0 0
        %960 = vperm.xlu0 %959, %v957
        %v961 = vpop.permute.xlu0 %960
        %v963 = vmul.f32 %v955, %v961
        %964 = vrot.lane.b32.xlu0 %v491, 120
        %v965 = vpop.permute.xlu0 %964
        %966 = vrot.lane.b32.xlu0 %v494, 120
        %v967 = vpop.permute.xlu0 %966
        %969 = vrot.lane.b32.xlu0 %v963, 88
        %v970 = vpop.permute.xlu0 %969
        %v971 = vsel %vm654, %v965, 0
        %v973 = vsel %vm654, %v967, 0
        %v975 = vsel %vm654, %v970, 0
        %977 = vmatprep.subr.mxu0 0.0
        %978 = vmatpush1.xpose.msra.mxu0 %v975
        %979 = vmatprep.subr.mxu0 0.0
        %980 = vmatpush1.xpose.msra.mxu0 0.0
        %981 = vmatprep.subr.mxu0 0.0
        %982 = vmatpush1.xpose.msra.mxu0 0.0
        %983 = vmatprep.subr.mxu0 0.0
        %984 = vmatpush1.xpose.msra.mxu0 0.0
        %985 = vmatprep.subr.mxu0 0.0
        %986 = vmatpush1.xpose.msra.mxu0 0.0
        %987 = vmatprep.subr.mxu0 0.0
        %988 = vmatpush1.xpose.msra.mxu0 0.0
        %989 = vmatprep.subr.mxu0 0.0
        %990 = vmatpush1.xpose.msra.mxu0 0.0
        %991 = vmatprep.subr.mxu0 0.0
        %992 = vmatpush1.xpose.msra.mxu0 0.0
        %993 = vmatprep.subr.mxu0 0.0
        %994 = vmatpush1.xpose.msra.mxu0 0.0
        %995 = vmatprep.subr.mxu0 0.0
        %996 = vmatpush1.xpose.msra.mxu0 0.0
        %997 = vmatprep.subr.mxu0 0.0
        %998 = vmatpush1.xpose.msra.mxu0 0.0
        %999 = vmatprep.subr.mxu0 0.0
        %1000 = vmatpush1.xpose.msra.mxu0 0.0
        %1001 = vmatprep.subr.mxu0 0.0
        %1002 = vmatpush1.xpose.msra.mxu0 0.0
        %1003 = vmatprep.subr.mxu0 0.0
        %1004 = vmatpush1.xpose.msra.mxu0 0.0
        %1005 = vmatprep.subr.mxu0 0.0
        %1006 = vmatpush1.xpose.msra.mxu0 0.0
        %1007 = vmatprep.subr.mxu0 0.0
        %1008 = vmatpush1.xpose.msra.mxu0 0.0
        %1009 = vmatprep.subr.mxu0 0.0
        %1010 = vmatpush1.xpose.msra.mxu0 0.0
        %1011 = vmatprep.subr.mxu0 0.0
        %1012 = vmatpush1.xpose.msra.mxu0 0.0
        %1013 = vmatprep.subr.mxu0 0.0
        %1014 = vmatpush1.xpose.msra.mxu0 0.0
        %1015 = vmatprep.subr.mxu0 0.0
        %1016 = vmatpush1.xpose.msra.mxu0 0.0
        %1017 = vmatprep.subr.mxu0 0.0
        %1018 = vmatpush1.xpose.msra.mxu0 0.0
        %1019 = vmatprep.subr.mxu0 0.0
        %1020 = vmatpush1.xpose.msra.mxu0 0.0
        %1021 = vmatprep.subr.mxu0 0.0
        %1022 = vmatpush1.xpose.msra.mxu0 0.0
        %1023 = vmatprep.subr.mxu0 0.0
        %1024 = vmatpush1.xpose.msra.mxu0 0.0
        %1025 = vmatprep.subr.mxu0 0.0
        %1026 = vmatpush1.xpose.msra.mxu0 0.0
        %1027 = vmatprep.subr.mxu0 0.0
        %1028 = vmatpush1.xpose.msra.mxu0 0.0
        %1029 = vmatprep.subr.mxu0 0.0
        %1030 = vmatpush1.xpose.msra.mxu0 0.0
        %1031 = vmatprep.subr.mxu0 0.0
        %1032 = vmatpush1.xpose.msra.mxu0 0.0
        %1033 = vmatprep.subr.mxu0 0.0
        %1034 = vmatpush1.xpose.msra.mxu0 0.0
        %1035 = vmatprep.subr.mxu0 0.0
        %1036 = vmatpush1.xpose.msra.mxu0 0.0
        %1037 = vmatprep.subr.mxu0 0.0
        %1038 = vmatpush1.xpose.msra.mxu0 0.0
        %1039 = vmatprep.subr.mxu0 0.0
        %1040 = vmatpush1.xpose.msra.mxu0 0.0
        %1041 = vmatprep.mubr.f32.mxu0 0.0
        %1042 = vmatmul.mubr.f32.gmra.mrb[0].mxu0 %v971
        %v1043 = vpop.f32.mrb[0].mxu0
        %v1044 = vadd.f32 0.0, %v1043
        %v1045 = vpop.f32.mrb[0].mxu0
        %1046 = vmatprep.mubr.f32.mxu0 0.0
        %1047 = vmatmul.mubr.f32.gmra.mrb[0].mxu0 %v973
        %v1048 = vpop.f32.mrb[0].mxu0
        %v1049 = vadd.f32 0.0, %v1048
        %v1050 = vpop.f32.mrb[0].mxu0
        %1051 = vdwg.mxu0
        %1053 = vrot.lane.b32.xlu0 %v946, 120
        %v1054 = vpop.permute.xlu0 %1053
        %1055 = vrot.lane.b32.xlu0 %v491, 88
        %v1056 = vpop.permute.xlu0 %1055
        %1057 = vrot.lane.b32.xlu0 %v494, 88
        %v1058 = vpop.permute.xlu0 %1057
        %v1059 = vsel %vm654, %v1054, 0
        %v1061 = vsel %vm654, %v1056, 0
        %v1063 = vsel %vm654, %v1058, 0
        %1065 = vmatprep.subr.mxu0 0.0
        %1066 = vmatpush1.xpose.msra.mxu0 %v1061
        %1067 = vmatprep.subr.mxu0 0.0
        %1068 = vmatpush1.xpose.msra.mxu0 %v1063
        %1069 = vmatprep.subr.mxu0 0.0
        %1070 = vmatpush1.xpose.msra.mxu0 0.0
        %1071 = vmatprep.subr.mxu0 0.0
        %1072 = vmatpush1.xpose.msra.mxu0 0.0
        %1073 = vmatprep.subr.mxu0 0.0
        %1074 = vmatpush1.xpose.msra.mxu0 0.0
        %1075 = vmatprep.subr.mxu0 0.0
        %1076 = vmatpush1.xpose.msra.mxu0 0.0
        %1077 = vmatprep.subr.mxu0 0.0
        %1078 = vmatpush1.xpose.msra.mxu0 0.0
        %1079 = vmatprep.subr.mxu0 0.0
        %1080 = vmatpush1.xpose.msra.mxu0 0.0
        %1081 = vmatprep.subr.mxu0 0.0
        %1082 = vmatpush1.xpose.msra.mxu0 0.0
        %1083 = vmatprep.subr.mxu0 0.0
        %1084 = vmatpush1.xpose.msra.mxu0 0.0
        %1085 = vmatprep.subr.mxu0 0.0
        %1086 = vmatpush1.xpose.msra.mxu0 0.0
        %1087 = vmatprep.subr.mxu0 0.0
        %1088 = vmatpush1.xpose.msra.mxu0 0.0
        %1089 = vmatprep.subr.mxu0 0.0
        %1090 = vmatpush1.xpose.msra.mxu0 0.0
        %1091 = vmatprep.subr.mxu0 0.0
        %1092 = vmatpush1.xpose.msra.mxu0 0.0
        %1093 = vmatprep.subr.mxu0 0.0
        %1094 = vmatpush1.xpose.msra.mxu0 0.0
        %1095 = vmatprep.subr.mxu0 0.0
        %1096 = vmatpush1.xpose.msra.mxu0 0.0
        %1097 = vmatprep.subr.mxu0 0.0
        %1098 = vmatpush1.xpose.msra.mxu0 0.0
        %1099 = vmatprep.subr.mxu0 0.0
        %1100 = vmatpush1.xpose.msra.mxu0 0.0
        %1101 = vmatprep.subr.mxu0 0.0
        %1102 = vmatpush1.xpose.msra.mxu0 0.0
        %1103 = vmatprep.subr.mxu0 0.0
        %1104 = vmatpush1.xpose.msra.mxu0 0.0
        %1105 = vmatprep.subr.mxu0 0.0
        %1106 = vmatpush1.xpose.msra.mxu0 0.0
        %1107 = vmatprep.subr.mxu0 0.0
        %1108 = vmatpush1.xpose.msra.mxu0 0.0
        %1109 = vmatprep.subr.mxu0 0.0
        %1110 = vmatpush1.xpose.msra.mxu0 0.0
        %1111 = vmatprep.subr.mxu0 0.0
        %1112 = vmatpush1.xpose.msra.mxu0 0.0
        %1113 = vmatprep.subr.mxu0 0.0
        %1114 = vmatpush1.xpose.msra.mxu0 0.0
        %1115 = vmatprep.subr.mxu0 0.0
        %1116 = vmatpush1.xpose.msra.mxu0 0.0
        %1117 = vmatprep.subr.mxu0 0.0
        %1118 = vmatpush1.xpose.msra.mxu0 0.0
        %1119 = vmatprep.subr.mxu0 0.0
        %1120 = vmatpush1.xpose.msra.mxu0 0.0
        %1121 = vmatprep.subr.mxu0 0.0
        %1122 = vmatpush1.xpose.msra.mxu0 0.0
        %1123 = vmatprep.subr.mxu0 0.0
        %1124 = vmatpush1.xpose.msra.mxu0 0.0
        %1125 = vmatprep.subr.mxu0 0.0
        %1126 = vmatpush1.xpose.msra.mxu0 0.0
        %1127 = vmatprep.subr.mxu0 0.0
        %1128 = vmatpush1.xpose.msra.mxu0 0.0
        %1129 = vmatprep.mubr.f32.mxu0 0.0
        %1130 = vmatmul.mubr.f32.gmra.mrb[0].mxu0 %v1059
        %v1131 = vpop.f32.mrb[0].mxu0
        %v1132 = vadd.f32 0.0, %v1131
        %v1133 = vpop.f32.mrb[0].mxu0
        %1134 = vdwg.mxu0
        %v1136 = vsel %vm819, %v1044, 0
        %v1139 = vsel %vm819, %v1049, 0
        %v1142 = vsel %vm826, %v1132, 0
        %1144 = vmatprep.subr.mxu0 0.0
        %1145 = vmatpush1.msra.mxu0 %v1142
        %1146 = vmatprep.subr.mxu0 0.0
        %1147 = vmatpush1.msra.mxu0 0.0
        %1148 = vmatprep.subr.mxu0 0.0
        %1149 = vmatpush1.msra.mxu0 0.0
        %1150 = vmatprep.subr.mxu0 0.0
        %1151 = vmatpush1.msra.mxu0 0.0
        %1152 = vmatprep.subr.mxu0 0.0
        %1153 = vmatpush1.msra.mxu0 0.0
        %1154 = vmatprep.subr.mxu0 0.0
        %1155 = vmatpush1.msra.mxu0 0.0
        %1156 = vmatprep.subr.mxu0 0.0
        %1157 = vmatpush1.msra.mxu0 0.0
        %1158 = vmatprep.subr.mxu0 0.0
        %1159 = vmatpush1.msra.mxu0 0.0
        %1160 = vmatprep.subr.mxu0 0.0
        %1161 = vmatpush1.msra.mxu0 0.0
        %1162 = vmatprep.subr.mxu0 0.0
        %1163 = vmatpush1.msra.mxu0 0.0
        %1164 = vmatprep.subr.mxu0 0.0
        %1165 = vmatpush1.msra.mxu0 0.0
        %1166 = vmatprep.subr.mxu0 0.0
        %1167 = vmatpush1.msra.mxu0 0.0
        %1168 = vmatprep.subr.mxu0 0.0
        %1169 = vmatpush1.msra.mxu0 0.0
        %1170 = vmatprep.subr.mxu0 0.0
        %1171 = vmatpush1.msra.mxu0 0.0
        %1172 = vmatprep.subr.mxu0 0.0
        %1173 = vmatpush1.msra.mxu0 0.0
        %1174 = vmatprep.subr.mxu0 0.0
        %1175 = vmatpush1.msra.mxu0 0.0
        %1176 = vmatprep.subr.mxu0 0.0
        %1177 = vmatpush1.msra.mxu0 0.0
        %1178 = vmatprep.subr.mxu0 0.0
        %1179 = vmatpush1.msra.mxu0 0.0
        %1180 = vmatprep.subr.mxu0 0.0
        %1181 = vmatpush1.msra.mxu0 0.0
        %1182 = vmatprep.subr.mxu0 0.0
        %1183 = vmatpush1.msra.mxu0 0.0
        %1184 = vmatprep.subr.mxu0 0.0
        %1185 = vmatpush1.msra.mxu0 0.0
        %1186 = vmatprep.subr.mxu0 0.0
        %1187 = vmatpush1.msra.mxu0 0.0
        %1188 = vmatprep.subr.mxu0 0.0
        %1189 = vmatpush1.msra.mxu0 0.0
        %1190 = vmatprep.subr.mxu0 0.0
        %1191 = vmatpush1.msra.mxu0 0.0
        %1192 = vmatprep.subr.mxu0 0.0
        %1193 = vmatpush1.msra.mxu0 0.0
        %1194 = vmatprep.subr.mxu0 0.0
        %1195 = vmatpush1.msra.mxu0 0.0
        %1196 = vmatprep.subr.mxu0 0.0
        %1197 = vmatpush1.msra.mxu0 0.0
        %1198 = vmatprep.subr.mxu0 0.0
        %1199 = vmatpush1.msra.mxu0 0.0
        %1200 = vmatprep.subr.mxu0 0.0
        %1201 = vmatpush1.msra.mxu0 0.0
        %1202 = vmatprep.subr.mxu0 0.0
        %1203 = vmatpush1.msra.mxu0 0.0
        %1204 = vmatprep.subr.mxu0 0.0
        %1205 = vmatpush1.msra.mxu0 0.0
        %1206 = vmatprep.subr.mxu0 0.0
        %1207 = vmatpush1.msra.mxu0 0.0
        %1208 = vmatprep.mubr.f32.mxu0 0.0
        %1209 = vmatmul.mubr.f32.gmra.mrb[0].mxu0 %v1136
        %v1210 = vpop.f32.mrb[0].mxu0
        %v1211 = vadd.f32 0.0, %v1210
        %v1212 = vpop.f32.mrb[0].mxu0
        %1213 = vmatprep.mubr.f32.mxu0 0.0
        %1214 = vmatmul.mubr.f32.gmra.mrb[0].mxu0 %v1139
        %v1215 = vpop.f32.mrb[0].mxu0
        %v1216 = vadd.f32 0.0, %v1215
        %v1217 = vpop.f32.mrb[0].mxu0
        %1218 = vdwg.mxu0
        %v1219 = vsel %vm617, %v1211, -1e+09
        %v1220 = vsel %vm618, %v1216, -1e+09
        %v1221 = vsel %vm907, %v1219, -inf
        %1222 = vmax.xlane.f32.xlu0 %v1221
        %v1223 = vpop.xlane.xlu0 %1222
        %v1224 = vsel %vm907, %v1220, -inf
        %1225 = vmax.xlane.f32.xlu0 %v1224
        %v1226 = vpop.xlane.xlu0 %1225
        %v1227 = vsub.f32 %v1219, %v1223
        %v1228 = vsub.f32 %v1220, %v1226
        %v1229 = vmul.f32 %v1227, 1.442695
        %v1230 = vpow.pop %v1229
        %v1231 = vmul.f32 %v1228, 1.442695
        %v1232 = vpow.pop %v1231
        %v1233 = vsel %vm907, %v1230, 0.0
        %1234 = vadd.xlane.f32.xlu0 %v1233
        %v1235 = vpop.xlane.xlu0 %1234
        %v1236 = vsel %vm907, %v1232, 0.0
        %1237 = vadd.xlane.f32.xlu0 %v1236
        %v1238 = vpop.xlane.xlu0 %1237
        %v1239 = vrcp.pop %v1235
        %v1240 = vrcp.pop %v1238
        %v1241 = vmul.f32 %v1230, %v1239
        %v1242 = vmul.f32 %v1232, %v1240
        %1243 = vrot.lane.b32.xlu0 %v619, 112
        %v1244 = vpop.permute.xlu0 %1243
        %v1246 = vsel %vm620, %v1244, 0.0
        %1247 = vadd.xlane.f32.xlu0 %v1246
        %v1248 = vpop.xlane.xlu0 %1247
        %v1249 = vadd.f32 %v1248, 1e-12
        %v1250 = vrsqrt.pop %v1249
        %v1251 = vmul.f32 %v536, %v1250
        %s1252 = scalar_lea.vmem %s7, 8
        %v1253 = vld [vmem:[%s1252] sm:$0xf]
        %1255 = vset.pattern.permute.xlu0 0
        %1256 = vperm.xlu0 %1255, %v1253
        %v1257 = vpop.permute.xlu0 %1256
        %v1259 = vmul.f32 %v1251, %v1257
        %1260 = vrot.lane.b32.xlu0 %v619, 80
        %v1261 = vpop.permute.xlu0 %1260
        %v1263 = vsel %vm620, %v1261, 0.0
        %1264 = vadd.xlane.f32.xlu0 %v1263
        %v1265 = vpop.xlane.xlu0 %1264
        %v1266 = vadd.f32 %v1265, 1e-12
        %v1267 = vrsqrt.pop %v1266
        %v1268 = vmul.f32 %v536, %v1267
        %s1269 = scalar_lea.vmem %s8, 8
        %v1270 = vld [vmem:[%s1269] sm:$0xf]
        %1272 = vset.pattern.permute.xlu0 0
        %1273 = vperm.xlu0 %1272, %v1270
        %v1274 = vpop.permute.xlu0 %1273
        %v1276 = vmul.f32 %v1268, %v1274
        %1277 = vrot.lane.b32.xlu0 %v491, 112
        %v1278 = vpop.permute.xlu0 %1277
        %1279 = vrot.lane.b32.xlu0 %v494, 112
        %v1280 = vpop.permute.xlu0 %1279
        %1282 = vrot.lane.b32.xlu0 %v1276, 80
        %v1283 = vpop.permute.xlu0 %1282
        %v1284 = vsel %vm654, %v1278, 0
        %v1286 = vsel %vm654, %v1280, 0
        %v1288 = vsel %vm654, %v1283, 0
        %1290 = vmatprep.subr.mxu0 0.0
        %1291 = vmatpush1.xpose.msra.mxu0 %v1288
        %1292 = vmatprep.subr.mxu0 0.0
        %1293 = vmatpush1.xpose.msra.mxu0 0.0
        %1294 = vmatprep.subr.mxu0 0.0
        %1295 = vmatpush1.xpose.msra.mxu0 0.0
        %1296 = vmatprep.subr.mxu0 0.0
        %1297 = vmatpush1.xpose.msra.mxu0 0.0
        %1298 = vmatprep.subr.mxu0 0.0
        %1299 = vmatpush1.xpose.msra.mxu0 0.0
        %1300 = vmatprep.subr.mxu0 0.0
        %1301 = vmatpush1.xpose.msra.mxu0 0.0
        %1302 = vmatprep.subr.mxu0 0.0
        %1303 = vmatpush1.xpose.msra.mxu0 0.0
        %1304 = vmatprep.subr.mxu0 0.0
        %1305 = vmatpush1.xpose.msra.mxu0 0.0
        %1306 = vmatprep.subr.mxu0 0.0
        %1307 = vmatpush1.xpose.msra.mxu0 0.0
        %1308 = vmatprep.subr.mxu0 0.0
        %1309 = vmatpush1.xpose.msra.mxu0 0.0
        %1310 = vmatprep.subr.mxu0 0.0
        %1311 = vmatpush1.xpose.msra.mxu0 0.0
        %1312 = vmatprep.subr.mxu0 0.0
        %1313 = vmatpush1.xpose.msra.mxu0 0.0
        %1314 = vmatprep.subr.mxu0 0.0
        %1315 = vmatpush1.xpose.msra.mxu0 0.0
        %1316 = vmatprep.subr.mxu0 0.0
        %1317 = vmatpush1.xpose.msra.mxu0 0.0
        %1318 = vmatprep.subr.mxu0 0.0
        %1319 = vmatpush1.xpose.msra.mxu0 0.0
        %1320 = vmatprep.subr.mxu0 0.0
        %1321 = vmatpush1.xpose.msra.mxu0 0.0
        %1322 = vmatprep.subr.mxu0 0.0
        %1323 = vmatpush1.xpose.msra.mxu0 0.0
        %1324 = vmatprep.subr.mxu0 0.0
        %1325 = vmatpush1.xpose.msra.mxu0 0.0
        %1326 = vmatprep.subr.mxu0 0.0
        %1327 = vmatpush1.xpose.msra.mxu0 0.0
        %1328 = vmatprep.subr.mxu0 0.0
        %1329 = vmatpush1.xpose.msra.mxu0 0.0
        %1330 = vmatprep.subr.mxu0 0.0
        %1331 = vmatpush1.xpose.msra.mxu0 0.0
        %1332 = vmatprep.subr.mxu0 0.0
        %1333 = vmatpush1.xpose.msra.mxu0 0.0
        %1334 = vmatprep.subr.mxu0 0.0
        %1335 = vmatpush1.xpose.msra.mxu0 0.0
        %1336 = vmatprep.subr.mxu0 0.0
        %1337 = vmatpush1.xpose.msra.mxu0 0.0
        %1338 = vmatprep.subr.mxu0 0.0
        %1339 = vmatpush1.xpose.msra.mxu0 0.0
        %1340 = vmatprep.subr.mxu0 0.0
        %1341 = vmatpush1.xpose.msra.mxu0 0.0
        %1342 = vmatprep.subr.mxu0 0.0
        %1343 = vmatpush1.xpose.msra.mxu0 0.0
        %1344 = vmatprep.subr.mxu0 0.0
        %1345 = vmatpush1.xpose.msra.mxu0 0.0
        %1346 = vmatprep.subr.mxu0 0.0
        %1347 = vmatpush1.xpose.msra.mxu0 0.0
        %1348 = vmatprep.subr.mxu0 0.0
        %1349 = vmatpush1.xpose.msra.mxu0 0.0
        %1350 = vmatprep.subr.mxu0 0.0
        %1351 = vmatpush1.xpose.msra.mxu0 0.0
        %1352 = vmatprep.subr.mxu0 0.0
        %1353 = vmatpush1.xpose.msra.mxu0 0.0
        %1354 = vmatprep.mubr.f32.mxu0 0.0
        %1355 = vmatmul.mubr.f32.gmra.mrb[0].mxu0 %v1284
        %v1356 = vpop.f32.mrb[0].mxu0
        %v1357 = vadd.f32 0.0, %v1356
        %v1358 = vpop.f32.mrb[0].mxu0
        %1359 = vmatprep.mubr.f32.mxu0 0.0
        %1360 = vmatmul.mubr.f32.gmra.mrb[0].mxu0 %v1286
        %v1361 = vpop.f32.mrb[0].mxu0
        %v1362 = vadd.f32 0.0, %v1361
        %v1363 = vpop.f32.mrb[0].mxu0
        %1364 = vdwg.mxu0
        %1366 = vrot.lane.b32.xlu0 %v1259, 112
        %v1367 = vpop.permute.xlu0 %1366
        %1368 = vrot.lane.b32.xlu0 %v491, 80
        %v1369 = vpop.permute.xlu0 %1368
        %1370 = vrot.lane.b32.xlu0 %v494, 80
        %v1371 = vpop.permute.xlu0 %1370
        %v1372 = vsel %vm654, %v1367, 0
        %v1374 = vsel %vm654, %v1369, 0
        %v1376 = vsel %vm654, %v1371, 0
        %1378 = vmatprep.subr.mxu0 0.0
        %1379 = vmatpush1.xpose.msra.mxu0 %v1374
        %1380 = vmatprep.subr.mxu0 0.0
        %1381 = vmatpush1.xpose.msra.mxu0 %v1376
        %1382 = vmatprep.subr.mxu0 0.0
        %1383 = vmatpush1.xpose.msra.mxu0 0.0
        %1384 = vmatprep.subr.mxu0 0.0
        %1385 = vmatpush1.xpose.msra.mxu0 0.0
        %1386 = vmatprep.subr.mxu0 0.0
        %1387 = vmatpush1.xpose.msra.mxu0 0.0
        %1388 = vmatprep.subr.mxu0 0.0
        %1389 = vmatpush1.xpose.msra.mxu0 0.0
        %1390 = vmatprep.subr.mxu0 0.0
        %1391 = vmatpush1.xpose.msra.mxu0 0.0
        %1392 = vmatprep.subr.mxu0 0.0
        %1393 = vmatpush1.xpose.msra.mxu0 0.0
        %1394 = vmatprep.subr.mxu0 0.0
        %1395 = vmatpush1.xpose.msra.mxu0 0.0
        %1396 = vmatprep.subr.mxu0 0.0
        %1397 = vmatpush1.xpose.msra.mxu0 0.0
        %1398 = vmatprep.subr.mxu0 0.0
        %1399 = vmatpush1.xpose.msra.mxu0 0.0
        %1400 = vmatprep.subr.mxu0 0.0
        %1401 = vmatpush1.xpose.msra.mxu0 0.0
        %1402 = vmatprep.subr.mxu0 0.0
        %1403 = vmatpush1.xpose.msra.mxu0 0.0
        %1404 = vmatprep.subr.mxu0 0.0
        %1405 = vmatpush1.xpose.msra.mxu0 0.0
        %1406 = vmatprep.subr.mxu0 0.0
        %1407 = vmatpush1.xpose.msra.mxu0 0.0
        %1408 = vmatprep.subr.mxu0 0.0
        %1409 = vmatpush1.xpose.msra.mxu0 0.0
        %1410 = vmatprep.subr.mxu0 0.0
        %1411 = vmatpush1.xpose.msra.mxu0 0.0
        %1412 = vmatprep.subr.mxu0 0.0
        %1413 = vmatpush1.xpose.msra.mxu0 0.0
        %1414 = vmatprep.subr.mxu0 0.0
        %1415 = vmatpush1.xpose.msra.mxu0 0.0
        %1416 = vmatprep.subr.mxu0 0.0
        %1417 = vmatpush1.xpose.msra.mxu0 0.0
        %1418 = vmatprep.subr.mxu0 0.0
        %1419 = vmatpush1.xpose.msra.mxu0 0.0
        %1420 = vmatprep.subr.mxu0 0.0
        %1421 = vmatpush1.xpose.msra.mxu0 0.0
        %1422 = vmatprep.subr.mxu0 0.0
        %1423 = vmatpush1.xpose.msra.mxu0 0.0
        %1424 = vmatprep.subr.mxu0 0.0
        %1425 = vmatpush1.xpose.msra.mxu0 0.0
        %1426 = vmatprep.subr.mxu0 0.0
        %1427 = vmatpush1.xpose.msra.mxu0 0.0
        %1428 = vmatprep.subr.mxu0 0.0
        %1429 = vmatpush1.xpose.msra.mxu0 0.0
        %1430 = vmatprep.subr.mxu0 0.0
        %1431 = vmatpush1.xpose.msra.mxu0 0.0
        %1432 = vmatprep.subr.mxu0 0.0
        %1433 = vmatpush1.xpose.msra.mxu0 0.0
        %1434 = vmatprep.subr.mxu0 0.0
        %1435 = vmatpush1.xpose.msra.mxu0 0.0
        %1436 = vmatprep.subr.mxu0 0.0
        %1437 = vmatpush1.xpose.msra.mxu0 0.0
        %1438 = vmatprep.subr.mxu0 0.0
        %1439 = vmatpush1.xpose.msra.mxu0 0.0
        %1440 = vmatprep.subr.mxu0 0.0
        %1441 = vmatpush1.xpose.msra.mxu0 0.0
        %1442 = vmatprep.mubr.f32.mxu0 0.0
        %1443 = vmatmul.mubr.f32.gmra.mrb[0].mxu0 %v1372
        %v1444 = vpop.f32.mrb[0].mxu0
        %v1445 = vadd.f32 0.0, %v1444
        %v1446 = vpop.f32.mrb[0].mxu0
        %1447 = vdwg.mxu0
        %v1449 = vsel %vm819, %v1357, 0
        %v1452 = vsel %vm819, %v1362, 0
        %v1455 = vsel %vm826, %v1445, 0
        %1457 = vmatprep.subr.mxu0 0.0
        %1458 = vmatpush1.msra.mxu0 %v1455
        %1459 = vmatprep.subr.mxu0 0.0
        %1460 = vmatpush1.msra.mxu0 0.0
        %1461 = vmatprep.subr.mxu0 0.0
        %1462 = vmatpush1.msra.mxu0 0.0
        %1463 = vmatprep.subr.mxu0 0.0
        %1464 = vmatpush1.msra.mxu0 0.0
        %1465 = vmatprep.subr.mxu0 0.0
        %1466 = vmatpush1.msra.mxu0 0.0
        %1467 = vmatprep.subr.mxu0 0.0
        %1468 = vmatpush1.msra.mxu0 0.0
        %1469 = vmatprep.subr.mxu0 0.0
        %1470 = vmatpush1.msra.mxu0 0.0
        %1471 = vmatprep.subr.mxu0 0.0
        %1472 = vmatpush1.msra.mxu0 0.0
        %1473 = vmatprep.subr.mxu0 0.0
        %1474 = vmatpush1.msra.mxu0 0.0
        %1475 = vmatprep.subr.mxu0 0.0
        %1476 = vmatpush1.msra.mxu0 0.0
        %1477 = vmatprep.subr.mxu0 0.0
        %1478 = vmatpush1.msra.mxu0 0.0
        %1479 = vmatprep.subr.mxu0 0.0
        %1480 = vmatpush1.msra.mxu0 0.0
        %1481 = vmatprep.subr.mxu0 0.0
        %1482 = vmatpush1.msra.mxu0 0.0
        %1483 = vmatprep.subr.mxu0 0.0
        %1484 = vmatpush1.msra.mxu0 0.0
        %1485 = vmatprep.subr.mxu0 0.0
        %1486 = vmatpush1.msra.mxu0 0.0
        %1487 = vmatprep.subr.mxu0 0.0
        %1488 = vmatpush1.msra.mxu0 0.0
        %1489 = vmatprep.subr.mxu0 0.0
        %1490 = vmatpush1.msra.mxu0 0.0
        %1491 = vmatprep.subr.mxu0 0.0
        %1492 = vmatpush1.msra.mxu0 0.0
        %1493 = vmatprep.subr.mxu0 0.0
        %1494 = vmatpush1.msra.mxu0 0.0
        %1495 = vmatprep.subr.mxu0 0.0
        %1496 = vmatpush1.msra.mxu0 0.0
        %1497 = vmatprep.subr.mxu0 0.0
        %1498 = vmatpush1.msra.mxu0 0.0
        %1499 = vmatprep.subr.mxu0 0.0
        %1500 = vmatpush1.msra.mxu0 0.0
        %1501 = vmatprep.subr.mxu0 0.0
        %1502 = vmatpush1.msra.mxu0 0.0
        %1503 = vmatprep.subr.mxu0 0.0
        %1504 = vmatpush1.msra.mxu0 0.0
        %1505 = vmatprep.subr.mxu0 0.0
        %1506 = vmatpush1.msra.mxu0 0.0
        %1507 = vmatprep.subr.mxu0 0.0
        %1508 = vmatpush1.msra.mxu0 0.0
        %1509 = vmatprep.subr.mxu0 0.0
        %1510 = vmatpush1.msra.mxu0 0.0
        %1511 = vmatprep.subr.mxu0 0.0
        %1512 = vmatpush1.msra.mxu0 0.0
        %1513 = vmatprep.subr.mxu0 0.0
        %1514 = vmatpush1.msra.mxu0 0.0
        %1515 = vmatprep.subr.mxu0 0.0
        %1516 = vmatpush1.msra.mxu0 0.0
        %1517 = vmatprep.subr.mxu0 0.0
        %1518 = vmatpush1.msra.mxu0 0.0
        %1519 = vmatprep.subr.mxu0 0.0
        %1520 = vmatpush1.msra.mxu0 0.0
        %1521 = vmatprep.mubr.f32.mxu0 0.0
        %1522 = vmatmul.mubr.f32.gmra.mrb[0].mxu0 %v1449
        %v1523 = vpop.f32.mrb[0].mxu0
        %v1524 = vadd.f32 0.0, %v1523
        %v1525 = vpop.f32.mrb[0].mxu0
        %1526 = vmatprep.mubr.f32.mxu0 0.0
        %1527 = vmatmul.mubr.f32.gmra.mrb[0].mxu0 %v1452
        %v1528 = vpop.f32.mrb[0].mxu0
        %v1529 = vadd.f32 0.0, %v1528
        %v1530 = vpop.f32.mrb[0].mxu0
        %1531 = vdwg.mxu0
        %v1532 = vsel %vm617, %v1524, -1e+09
        %v1533 = vsel %vm618, %v1529, -1e+09
        %v1534 = vsel %vm907, %v1532, -inf
        %1535 = vmax.xlane.f32.xlu0 %v1534
        %v1536 = vpop.xlane.xlu0 %1535
        %v1537 = vsel %vm907, %v1533, -inf
        %1538 = vmax.xlane.f32.xlu0 %v1537
        %v1539 = vpop.xlane.xlu0 %1538
        %v1540 = vsub.f32 %v1532, %v1536
        %v1541 = vsub.f32 %v1533, %v1539
        %v1542 = vmul.f32 %v1540, 1.442695
        %v1543 = vpow.pop %v1542
        %v1544 = vmul.f32 %v1541, 1.442695
        %v1545 = vpow.pop %v1544
        %v1546 = vsel %vm907, %v1543, 0.0
        %1547 = vadd.xlane.f32.xlu0 %v1546
        %v1548 = vpop.xlane.xlu0 %1547
        %v1549 = vsel %vm907, %v1545, 0.0
        %1550 = vadd.xlane.f32.xlu0 %v1549
        %v1551 = vpop.xlane.xlu0 %1550
        %v1552 = vrcp.pop %v1548
        %v1553 = vrcp.pop %v1551
        %v1554 = vmul.f32 %v1543, %v1552
        %v1555 = vmul.f32 %v1545, %v1553
        %1556 = vrot.lane.b32.xlu0 %v619, 104
        %v1557 = vpop.permute.xlu0 %1556
        %v1559 = vsel %vm620, %v1557, 0.0
        %1560 = vadd.xlane.f32.xlu0 %v1559
        %v1561 = vpop.xlane.xlu0 %1560
        %v1562 = vadd.f32 %v1561, 1e-12
        %v1563 = vrsqrt.pop %v1562
        %v1564 = vmul.f32 %v536, %v1563
        %s1565 = scalar_lea.vmem %s7, 12
        %v1566 = vld [vmem:[%s1565] sm:$0xf]
        %1568 = vset.pattern.permute.xlu0 0
        %1569 = vperm.xlu0 %1568, %v1566
        %v1570 = vpop.permute.xlu0 %1569
        %v1572 = vmul.f32 %v1564, %v1570
        %1573 = vrot.lane.b32.xlu0 %v619, 72
        %v1574 = vpop.permute.xlu0 %1573
        %v1576 = vsel %vm620, %v1574, 0.0
        %1577 = vadd.xlane.f32.xlu0 %v1576
        %v1578 = vpop.xlane.xlu0 %1577
        %v1579 = vadd.f32 %v1578, 1e-12
        %v1580 = vrsqrt.pop %v1579
        %v1581 = vmul.f32 %v536, %v1580
        %s1582 = scalar_lea.vmem %s8, 12
        %v1583 = vld [vmem:[%s1582] sm:$0xf]
        %1585 = vset.pattern.permute.xlu0 0
        %1586 = vperm.xlu0 %1585, %v1583
        %v1587 = vpop.permute.xlu0 %1586
        %v1589 = vmul.f32 %v1581, %v1587
        %1590 = vrot.lane.b32.xlu0 %v491, 104
        %v1591 = vpop.permute.xlu0 %1590
        %1592 = vrot.lane.b32.xlu0 %v494, 104
        %v1593 = vpop.permute.xlu0 %1592
        %1595 = vrot.lane.b32.xlu0 %v1589, 72
        %v1596 = vpop.permute.xlu0 %1595
        %v1597 = vsel %vm654, %v1591, 0
        %v1599 = vsel %vm654, %v1593, 0
        %v1601 = vsel %vm654, %v1596, 0
        %1603 = vmatprep.subr.mxu0 0.0
        %1604 = vmatpush1.xpose.msra.mxu0 %v1601
        %1605 = vmatprep.subr.mxu0 0.0
        %1606 = vmatpush1.xpose.msra.mxu0 0.0
        %1607 = vmatprep.subr.mxu0 0.0
        %1608 = vmatpush1.xpose.msra.mxu0 0.0
        %1609 = vmatprep.subr.mxu0 0.0
        %1610 = vmatpush1.xpose.msra.mxu0 0.0
        %1611 = vmatprep.subr.mxu0 0.0
        %1612 = vmatpush1.xpose.msra.mxu0 0.0
        %1613 = vmatprep.subr.mxu0 0.0
        %1614 = vmatpush1.xpose.msra.mxu0 0.0
        %1615 = vmatprep.subr.mxu0 0.0
        %1616 = vmatpush1.xpose.msra.mxu0 0.0
        %1617 = vmatprep.subr.mxu0 0.0
        %1618 = vmatpush1.xpose.msra.mxu0 0.0
        %1619 = vmatprep.subr.mxu0 0.0
        %1620 = vmatpush1.xpose.msra.mxu0 0.0
        %1621 = vmatprep.subr.mxu0 0.0
        %1622 = vmatpush1.xpose.msra.mxu0 0.0
        %1623 = vmatprep.subr.mxu0 0.0
        %1624 = vmatpush1.xpose.msra.mxu0 0.0
        %1625 = vmatprep.subr.mxu0 0.0
        %1626 = vmatpush1.xpose.msra.mxu0 0.0
        %1627 = vmatprep.subr.mxu0 0.0
        %1628 = vmatpush1.xpose.msra.mxu0 0.0
        %1629 = vmatprep.subr.mxu0 0.0
        %1630 = vmatpush1.xpose.msra.mxu0 0.0
        %1631 = vmatprep.subr.mxu0 0.0
        %1632 = vmatpush1.xpose.msra.mxu0 0.0
        %1633 = vmatprep.subr.mxu0 0.0
        %1634 = vmatpush1.xpose.msra.mxu0 0.0
        %1635 = vmatprep.subr.mxu0 0.0
        %1636 = vmatpush1.xpose.msra.mxu0 0.0
        %1637 = vmatprep.subr.mxu0 0.0
        %1638 = vmatpush1.xpose.msra.mxu0 0.0
        %1639 = vmatprep.subr.mxu0 0.0
        %1640 = vmatpush1.xpose.msra.mxu0 0.0
        %1641 = vmatprep.subr.mxu0 0.0
        %1642 = vmatpush1.xpose.msra.mxu0 0.0
        %1643 = vmatprep.subr.mxu0 0.0
        %1644 = vmatpush1.xpose.msra.mxu0 0.0
        %1645 = vmatprep.subr.mxu0 0.0
        %1646 = vmatpush1.xpose.msra.mxu0 0.0
        %1647 = vmatprep.subr.mxu0 0.0
        %1648 = vmatpush1.xpose.msra.mxu0 0.0
        %1649 = vmatprep.subr.mxu0 0.0
        %1650 = vmatpush1.xpose.msra.mxu0 0.0
        %1651 = vmatprep.subr.mxu0 0.0
        %1652 = vmatpush1.xpose.msra.mxu0 0.0
        %1653 = vmatprep.subr.mxu0 0.0
        %1654 = vmatpush1.xpose.msra.mxu0 0.0
        %1655 = vmatprep.subr.mxu0 0.0
        %1656 = vmatpush1.xpose.msra.mxu0 0.0
        %1657 = vmatprep.subr.mxu0 0.0
        %1658 = vmatpush1.xpose.msra.mxu0 0.0
        %1659 = vmatprep.subr.mxu0 0.0
        %1660 = vmatpush1.xpose.msra.mxu0 0.0
        %1661 = vmatprep.subr.mxu0 0.0
        %1662 = vmatpush1.xpose.msra.mxu0 0.0
        %1663 = vmatprep.subr.mxu0 0.0
        %1664 = vmatpush1.xpose.msra.mxu0 0.0
        %1665 = vmatprep.subr.mxu0 0.0
        %1666 = vmatpush1.xpose.msra.mxu0 0.0
        %1667 = vmatprep.mubr.f32.mxu0 0.0
        %1668 = vmatmul.mubr.f32.gmra.mrb[0].mxu0 %v1597
        %v1669 = vpop.f32.mrb[0].mxu0
        %v1670 = vadd.f32 0.0, %v1669
        %v1671 = vpop.f32.mrb[0].mxu0
        %1672 = vmatprep.mubr.f32.mxu0 0.0
        %1673 = vmatmul.mubr.f32.gmra.mrb[0].mxu0 %v1599
        %v1674 = vpop.f32.mrb[0].mxu0
        %v1675 = vadd.f32 0.0, %v1674
        %v1676 = vpop.f32.mrb[0].mxu0
        %1677 = vdwg.mxu0
        %1679 = vrot.lane.b32.xlu0 %v1572, 104
        %v1680 = vpop.permute.xlu0 %1679
        %1681 = vrot.lane.b32.xlu0 %v491, 72
        %v1682 = vpop.permute.xlu0 %1681
        %1683 = vrot.lane.b32.xlu0 %v494, 72
        %v1684 = vpop.permute.xlu0 %1683
        %v1685 = vsel %vm654, %v1680, 0
        %v1687 = vsel %vm654, %v1682, 0
        %v1689 = vsel %vm654, %v1684, 0
        %1691 = vmatprep.subr.mxu0 0.0
        %1692 = vmatpush1.xpose.msra.mxu0 %v1687
        %1693 = vmatprep.subr.mxu0 0.0
        %1694 = vmatpush1.xpose.msra.mxu0 %v1689
        %1695 = vmatprep.subr.mxu0 0.0
        %1696 = vmatpush1.xpose.msra.mxu0 0.0
        %1697 = vmatprep.subr.mxu0 0.0
        %1698 = vmatpush1.xpose.msra.mxu0 0.0
        %1699 = vmatprep.subr.mxu0 0.0
        %1700 = vmatpush1.xpose.msra.mxu0 0.0
        %1701 = vmatprep.subr.mxu0 0.0
        %1702 = vmatpush1.xpose.msra.mxu0 0.0
        %1703 = vmatprep.subr.mxu0 0.0
        %1704 = vmatpush1.xpose.msra.mxu0 0.0
        %1705 = vmatprep.subr.mxu0 0.0
        %1706 = vmatpush1.xpose.msra.mxu0 0.0
        %1707 = vmatprep.subr.mxu0 0.0
        %1708 = vmatpush1.xpose.msra.mxu0 0.0
        %1709 = vmatprep.subr.mxu0 0.0
        %1710 = vmatpush1.xpose.msra.mxu0 0.0
        %1711 = vmatprep.subr.mxu0 0.0
        %1712 = vmatpush1.xpose.msra.mxu0 0.0
        %1713 = vmatprep.subr.mxu0 0.0
        %1714 = vmatpush1.xpose.msra.mxu0 0.0
        %1715 = vmatprep.subr.mxu0 0.0
        %1716 = vmatpush1.xpose.msra.mxu0 0.0
        %1717 = vmatprep.subr.mxu0 0.0
        %1718 = vmatpush1.xpose.msra.mxu0 0.0
        %1719 = vmatprep.subr.mxu0 0.0
        %1720 = vmatpush1.xpose.msra.mxu0 0.0
        %1721 = vmatprep.subr.mxu0 0.0
        %1722 = vmatpush1.xpose.msra.mxu0 0.0
        %1723 = vmatprep.subr.mxu0 0.0
        %1724 = vmatpush1.xpose.msra.mxu0 0.0
        %1725 = vmatprep.subr.mxu0 0.0
        %1726 = vmatpush1.xpose.msra.mxu0 0.0
        %1727 = vmatprep.subr.mxu0 0.0
        %1728 = vmatpush1.xpose.msra.mxu0 0.0
        %1729 = vmatprep.subr.mxu0 0.0
        %1730 = vmatpush1.xpose.msra.mxu0 0.0
        %1731 = vmatprep.subr.mxu0 0.0
        %1732 = vmatpush1.xpose.msra.mxu0 0.0
        %1733 = vmatprep.subr.mxu0 0.0
        %1734 = vmatpush1.xpose.msra.mxu0 0.0
        %1735 = vmatprep.subr.mxu0 0.0
        %1736 = vmatpush1.xpose.msra.mxu0 0.0
        %1737 = vmatprep.subr.mxu0 0.0
        %1738 = vmatpush1.xpose.msra.mxu0 0.0
        %1739 = vmatprep.subr.mxu0 0.0
        %1740 = vmatpush1.xpose.msra.mxu0 0.0
        %1741 = vmatprep.subr.mxu0 0.0
        %1742 = vmatpush1.xpose.msra.mxu0 0.0
        %1743 = vmatprep.subr.mxu0 0.0
        %1744 = vmatpush1.xpose.msra.mxu0 0.0
        %1745 = vmatprep.subr.mxu0 0.0
        %1746 = vmatpush1.xpose.msra.mxu0 0.0
        %1747 = vmatprep.subr.mxu0 0.0
        %1748 = vmatpush1.xpose.msra.mxu0 0.0
        %1749 = vmatprep.subr.mxu0 0.0
        %1750 = vmatpush1.xpose.msra.mxu0 0.0
        %1751 = vmatprep.subr.mxu0 0.0
        %1752 = vmatpush1.xpose.msra.mxu0 0.0
        %1753 = vmatprep.subr.mxu0 0.0
        %1754 = vmatpush1.xpose.msra.mxu0 0.0
        %1755 = vmatprep.mubr.f32.mxu0 0.0
        %1756 = vmatmul.mubr.f32.gmra.mrb[0].mxu0 %v1685
        %v1757 = vpop.f32.mrb[0].mxu0
        %v1758 = vadd.f32 0.0, %v1757
        %v1759 = vpop.f32.mrb[0].mxu0
        %1760 = vdwg.mxu0
        %v1762 = vsel %vm819, %v1670, 0
        %v1765 = vsel %vm819, %v1675, 0
        %v1768 = vsel %vm826, %v1758, 0
        %1770 = vmatprep.subr.mxu0 0.0
        %1771 = vmatpush1.msra.mxu0 %v1768
        %1772 = vmatprep.subr.mxu0 0.0
        %1773 = vmatpush1.msra.mxu0 0.0
        %1774 = vmatprep.subr.mxu0 0.0
        %1775 = vmatpush1.msra.mxu0 0.0
        %1776 = vmatprep.subr.mxu0 0.0
        %1777 = vmatpush1.msra.mxu0 0.0
        %1778 = vmatprep.subr.mxu0 0.0
        %1779 = vmatpush1.msra.mxu0 0.0
        %1780 = vmatprep.subr.mxu0 0.0
        %1781 = vmatpush1.msra.mxu0 0.0
        %1782 = vmatprep.subr.mxu0 0.0
        %1783 = vmatpush1.msra.mxu0 0.0
        %1784 = vmatprep.subr.mxu0 0.0
        %1785 = vmatpush1.msra.mxu0 0.0
        %1786 = vmatprep.subr.mxu0 0.0
        %1787 = vmatpush1.msra.mxu0 0.0
        %1788 = vmatprep.subr.mxu0 0.0
        %1789 = vmatpush1.msra.mxu0 0.0
        %1790 = vmatprep.subr.mxu0 0.0
        %1791 = vmatpush1.msra.mxu0 0.0
        %1792 = vmatprep.subr.mxu0 0.0
        %1793 = vmatpush1.msra.mxu0 0.0
        %1794 = vmatprep.subr.mxu0 0.0
        %1795 = vmatpush1.msra.mxu0 0.0
        %1796 = vmatprep.subr.mxu0 0.0
        %1797 = vmatpush1.msra.mxu0 0.0
        %1798 = vmatprep.subr.mxu0 0.0
        %1799 = vmatpush1.msra.mxu0 0.0
        %1800 = vmatprep.subr.mxu0 0.0
        %1801 = vmatpush1.msra.mxu0 0.0
        %1802 = vmatprep.subr.mxu0 0.0
        %1803 = vmatpush1.msra.mxu0 0.0
        %1804 = vmatprep.subr.mxu0 0.0
        %1805 = vmatpush1.msra.mxu0 0.0
        %1806 = vmatprep.subr.mxu0 0.0
        %1807 = vmatpush1.msra.mxu0 0.0
        %1808 = vmatprep.subr.mxu0 0.0
        %1809 = vmatpush1.msra.mxu0 0.0
        %1810 = vmatprep.subr.mxu0 0.0
        %1811 = vmatpush1.msra.mxu0 0.0
        %1812 = vmatprep.subr.mxu0 0.0
        %1813 = vmatpush1.msra.mxu0 0.0
        %1814 = vmatprep.subr.mxu0 0.0
        %1815 = vmatpush1.msra.mxu0 0.0
        %1816 = vmatprep.subr.mxu0 0.0
        %1817 = vmatpush1.msra.mxu0 0.0
        %1818 = vmatprep.subr.mxu0 0.0
        %1819 = vmatpush1.msra.mxu0 0.0
        %1820 = vmatprep.subr.mxu0 0.0
        %1821 = vmatpush1.msra.mxu0 0.0
        %1822 = vmatprep.subr.mxu0 0.0
        %1823 = vmatpush1.msra.mxu0 0.0
        %1824 = vmatprep.subr.mxu0 0.0
        %1825 = vmatpush1.msra.mxu0 0.0
        %1826 = vmatprep.subr.mxu0 0.0
        %1827 = vmatpush1.msra.mxu0 0.0
        %1828 = vmatprep.subr.mxu0 0.0
        %1829 = vmatpush1.msra.mxu0 0.0
        %1830 = vmatprep.subr.mxu0 0.0
        %1831 = vmatpush1.msra.mxu0 0.0
        %1832 = vmatprep.subr.mxu0 0.0
        %1833 = vmatpush1.msra.mxu0 0.0
        %1834 = vmatprep.mubr.f32.mxu0 0.0
        %1835 = vmatmul.mubr.f32.gmra.mrb[0].mxu0 %v1762
        %v1836 = vpop.f32.mrb[0].mxu0
        %v1837 = vadd.f32 0.0, %v1836
        %v1838 = vpop.f32.mrb[0].mxu0
        %1839 = vmatprep.mubr.f32.mxu0 0.0
        %1840 = vmatmul.mubr.f32.gmra.mrb[0].mxu0 %v1765
        %v1841 = vpop.f32.mrb[0].mxu0
        %v1842 = vadd.f32 0.0, %v1841
        %v1843 = vpop.f32.mrb[0].mxu0
        %1844 = vdwg.mxu0
        %v1845 = vsel %vm617, %v1837, -1e+09
        %v1846 = vsel %vm618, %v1842, -1e+09
        %v1847 = vsel %vm907, %v1845, -inf
        %1848 = vmax.xlane.f32.xlu0 %v1847
        %v1849 = vpop.xlane.xlu0 %1848
        %v1850 = vsel %vm907, %v1846, -inf
        %1851 = vmax.xlane.f32.xlu0 %v1850
        %v1852 = vpop.xlane.xlu0 %1851
        %v1853 = vsub.f32 %v1845, %v1849
        %v1854 = vsub.f32 %v1846, %v1852
        %v1855 = vmul.f32 %v1853, 1.442695
        %v1856 = vpow.pop %v1855
        %v1857 = vmul.f32 %v1854, 1.442695
        %v1858 = vpow.pop %v1857
        %v1859 = vsel %vm907, %v1856, 0.0
        %1860 = vadd.xlane.f32.xlu0 %v1859
        %v1861 = vpop.xlane.xlu0 %1860
        %v1862 = vsel %vm907, %v1858, 0.0
        %1863 = vadd.xlane.f32.xlu0 %v1862
        %v1864 = vpop.xlane.xlu0 %1863
        %v1865 = vrcp.pop %v1861
        %v1866 = vrcp.pop %v1864
        %v1867 = vmul.f32 %v1856, %v1865
        %v1868 = vmul.f32 %v1858, %v1866
        %v1869 = vstv %s427
        %v1870 = vmul.f32 %v1869, %v1241
        %v1871 = vmul.f32 %v1869, %v1242
        %v1872 = vsub.f32 %v928, %v1870
        %v1873 = vsub.f32 %v929, %v1871
        %v1874 = vstv %s428
        %v1875 = vmul.f32 %v1874, %v1554
        %v1876 = vmul.f32 %v1874, %v1555
        %v1877 = vadd.f32 %v1872, %v1875
        %v1878 = vadd.f32 %v1873, %v1876
        %v1879 = vsub.f32 %v1877, %v928
        %v1880 = vsub.f32 %v1878, %v929
        %1881 = vrot.lane.b32.xlu0 %v491, 64
        %v1882 = vpop.permute.xlu0 %1881
        %1883 = vrot.lane.b32.xlu0 %v494, 64
        %v1884 = vpop.permute.xlu0 %1883
        %v1888 = vsel %vm907, %v1879, 0
        %v1891 = vsel %vm907, %v1880, 0
        %1893 = vmatprep.subr.mxu0 0.0
        %1894 = vmatpush1.msra.mxu0 %v1882
        %1895 = vmatprep.subr.mxu0 0.0
        %1896 = vmatpush1.msra.mxu0 %v1884
        %1897 = vmatprep.subr.mxu0 0.0
        %1898 = vmatpush1.msra.mxu0 0.0
        %1899 = vmatprep.subr.mxu0 0.0
        %1900 = vmatpush1.msra.mxu0 0.0
        %1901 = vmatprep.subr.mxu0 0.0
        %1902 = vmatpush1.msra.mxu0 0.0
        %1903 = vmatprep.subr.mxu0 0.0
        %1904 = vmatpush1.msra.mxu0 0.0
        %1905 = vmatprep.subr.mxu0 0.0
        %1906 = vmatpush1.msra.mxu0 0.0
        %1907 = vmatprep.subr.mxu0 0.0
        %1908 = vmatpush1.msra.mxu0 0.0
        %1909 = vmatprep.subr.mxu0 0.0
        %1910 = vmatpush1.msra.mxu0 0.0
        %1911 = vmatprep.subr.mxu0 0.0
        %1912 = vmatpush1.msra.mxu0 0.0
        %1913 = vmatprep.subr.mxu0 0.0
        %1914 = vmatpush1.msra.mxu0 0.0
        %1915 = vmatprep.subr.mxu0 0.0
        %1916 = vmatpush1.msra.mxu0 0.0
        %1917 = vmatprep.subr.mxu0 0.0
        %1918 = vmatpush1.msra.mxu0 0.0
        %1919 = vmatprep.subr.mxu0 0.0
        %1920 = vmatpush1.msra.mxu0 0.0
        %1921 = vmatprep.subr.mxu0 0.0
        %1922 = vmatpush1.msra.mxu0 0.0
        %1923 = vmatprep.subr.mxu0 0.0
        %1924 = vmatpush1.msra.mxu0 0.0
        %1925 = vmatprep.subr.mxu0 0.0
        %1926 = vmatpush1.msra.mxu0 0.0
        %1927 = vmatprep.subr.mxu0 0.0
        %1928 = vmatpush1.msra.mxu0 0.0
        %1929 = vmatprep.subr.mxu0 0.0
        %1930 = vmatpush1.msra.mxu0 0.0
        %1931 = vmatprep.subr.mxu0 0.0
        %1932 = vmatpush1.msra.mxu0 0.0
        %1933 = vmatprep.subr.mxu0 0.0
        %1934 = vmatpush1.msra.mxu0 0.0
        %1935 = vmatprep.subr.mxu0 0.0
        %1936 = vmatpush1.msra.mxu0 0.0
        %1937 = vmatprep.subr.mxu0 0.0
        %1938 = vmatpush1.msra.mxu0 0.0
        %1939 = vmatprep.subr.mxu0 0.0
        %1940 = vmatpush1.msra.mxu0 0.0
        %1941 = vmatprep.subr.mxu0 0.0
        %1942 = vmatpush1.msra.mxu0 0.0
        %1943 = vmatprep.subr.mxu0 0.0
        %1944 = vmatpush1.msra.mxu0 0.0
        %1945 = vmatprep.subr.mxu0 0.0
        %1946 = vmatpush1.msra.mxu0 0.0
        %1947 = vmatprep.subr.mxu0 0.0
        %1948 = vmatpush1.msra.mxu0 0.0
        %1949 = vmatprep.subr.mxu0 0.0
        %1950 = vmatpush1.msra.mxu0 0.0
        %1951 = vmatprep.subr.mxu0 0.0
        %1952 = vmatpush1.msra.mxu0 0.0
        %1953 = vmatprep.subr.mxu0 0.0
        %1954 = vmatpush1.msra.mxu0 0.0
        %1955 = vmatprep.subr.mxu0 0.0
        %1956 = vmatpush1.msra.mxu0 0.0
        %1957 = vmatprep.mubr.f32.mxu0 0.0
        %1958 = vmatmul.mubr.f32.gmra.mrb[0].mxu0 %v1888
        %v1959 = vpop.f32.mrb[0].mxu0
        %v1960 = vadd.f32 0.0, %v1959
        %v1961 = vpop.f32.mrb[0].mxu0
        %1962 = vmatprep.mubr.f32.mxu0 0.0
        %1963 = vmatmul.mubr.f32.gmra.mrb[0].mxu0 %v1891
        %v1964 = vpop.f32.mrb[0].mxu0
        %v1965 = vadd.f32 0.0, %v1964
        %v1966 = vpop.f32.mrb[0].mxu0
        %1967 = vdwg.mxu0
        %v1968 = vmul.f32 %v1960, %v1960
        %v1969 = vmul.f32 %v1965, %v1965
        %v1970 = vsel %vm907, %v1968, 0.0
        %1971 = vadd.xlane.f32.xlu0 %v1970
        %v1972 = vpop.xlane.xlu0 %1971
        %v1973 = vsel %vm907, %v1969, 0.0
        %1974 = vadd.xlane.f32.xlu0 %v1973
        %v1975 = vpop.xlane.xlu0 %1974
        %v1976 = vrcp.pop 16.0
        %v1977 = vmul.f32 %v1972, %v1976
        %v1978 = vmul.f32 %v1975, %v1976
        %v1979 = vadd.f32 %v1977, 1e-05
        %v1980 = vadd.f32 %v1978, 1e-05
        %v1981 = vrsqrt.pop %v1979
        %v1982 = vrsqrt.pop %v1980
        %v1983 = vmul.f32 %v1960, %v1981
        %v1984 = vmul.f32 %v1965, %v1982
        %v1985 = vld [vmem:[%s9] sm:$0x1]
        %v1987 = vlaneseq
        %v1988 = vshrl.u32 %v1987, 7
        %v1989 = vsub.s32 0, %v1988
        %v1990 = vrot.slane %v1985, %v1989
        %v1992 = vmul.f32 %v1983, %v1990
        %v1993 = vmul.f32 %v1984, %v1990
        %v1994 = vmul.f32 %v1869, %v1867
        %v1995 = vmul.f32 %v1869, %v1868
        %v1996 = vsub.f32 %v1554, %v1994
        %v1997 = vsub.f32 %v1555, %v1995
        %v1998 = vmul.f32 %v1874, %v1867
        %v1999 = vmul.f32 %v1874, %v1868
        %v2000 = vadd.f32 %v1996, %v1998
        %v2001 = vadd.f32 %v1997, %v1999
        %v2002 = vsub.f32 %v2000, %v1241
        %v2003 = vsub.f32 %v2001, %v1242
        %2004 = vrot.lane.b32.xlu0 %v491, 48
        %v2005 = vpop.permute.xlu0 %2004
        %2006 = vrot.lane.b32.xlu0 %v494, 48
        %v2007 = vpop.permute.xlu0 %2006
        %v2011 = vsel %vm907, %v2002, 0
        %v2014 = vsel %vm907, %v2003, 0
        %2016 = vmatprep.subr.mxu0 0.0
        %2017 = vmatpush1.msra.mxu0 %v2005
        %2018 = vmatprep.subr.mxu0 0.0
        %2019 = vmatpush1.msra.mxu0 %v2007
        %2020 = vmatprep.subr.mxu0 0.0
        %2021 = vmatpush1.msra.mxu0 0.0
        %2022 = vmatprep.subr.mxu0 0.0
        %2023 = vmatpush1.msra.mxu0 0.0
        %2024 = vmatprep.subr.mxu0 0.0
        %2025 = vmatpush1.msra.mxu0 0.0
        %2026 = vmatprep.subr.mxu0 0.0
        %2027 = vmatpush1.msra.mxu0 0.0
        %2028 = vmatprep.subr.mxu0 0.0
        %2029 = vmatpush1.msra.mxu0 0.0
        %2030 = vmatprep.subr.mxu0 0.0
        %2031 = vmatpush1.msra.mxu0 0.0
        %2032 = vmatprep.subr.mxu0 0.0
        %2033 = vmatpush1.msra.mxu0 0.0
        %2034 = vmatprep.subr.mxu0 0.0
        %2035 = vmatpush1.msra.mxu0 0.0
        %2036 = vmatprep.subr.mxu0 0.0
        %2037 = vmatpush1.msra.mxu0 0.0
        %2038 = vmatprep.subr.mxu0 0.0
        %2039 = vmatpush1.msra.mxu0 0.0
        %2040 = vmatprep.subr.mxu0 0.0
        %2041 = vmatpush1.msra.mxu0 0.0
        %2042 = vmatprep.subr.mxu0 0.0
        %2043 = vmatpush1.msra.mxu0 0.0
        %2044 = vmatprep.subr.mxu0 0.0
        %2045 = vmatpush1.msra.mxu0 0.0
        %2046 = vmatprep.subr.mxu0 0.0
        %2047 = vmatpush1.msra.mxu0 0.0
        %2048 = vmatprep.subr.mxu0 0.0
        %2049 = vmatpush1.msra.mxu0 0.0
        %2050 = vmatprep.subr.mxu0 0.0
        %2051 = vmatpush1.msra.mxu0 0.0
        %2052 = vmatprep.subr.mxu0 0.0
        %2053 = vmatpush1.msra.mxu0 0.0
        %2054 = vmatprep.subr.mxu0 0.0
        %2055 = vmatpush1.msra.mxu0 0.0
        %2056 = vmatprep.subr.mxu0 0.0
        %2057 = vmatpush1.msra.mxu0 0.0
        %2058 = vmatprep.subr.mxu0 0.0
        %2059 = vmatpush1.msra.mxu0 0.0
        %2060 = vmatprep.subr.mxu0 0.0
        %2061 = vmatpush1.msra.mxu0 0.0
        %2062 = vmatprep.subr.mxu0 0.0
        %2063 = vmatpush1.msra.mxu0 0.0
        %2064 = vmatprep.subr.mxu0 0.0
        %2065 = vmatpush1.msra.mxu0 0.0
        %2066 = vmatprep.subr.mxu0 0.0
        %2067 = vmatpush1.msra.mxu0 0.0
        %2068 = vmatprep.subr.mxu0 0.0
        %2069 = vmatpush1.msra.mxu0 0.0
        %2070 = vmatprep.subr.mxu0 0.0
        %2071 = vmatpush1.msra.mxu0 0.0
        %2072 = vmatprep.subr.mxu0 0.0
        %2073 = vmatpush1.msra.mxu0 0.0
        %2074 = vmatprep.subr.mxu0 0.0
        %2075 = vmatpush1.msra.mxu0 0.0
        %2076 = vmatprep.subr.mxu0 0.0
        %2077 = vmatpush1.msra.mxu0 0.0
        %2078 = vmatprep.subr.mxu0 0.0
        %2079 = vmatpush1.msra.mxu0 0.0
        %2080 = vmatprep.mubr.f32.mxu0 0.0
        %2081 = vmatmul.mubr.f32.gmra.mrb[0].mxu0 %v2011
        %v2082 = vpop.f32.mrb[0].mxu0
        %v2083 = vadd.f32 0.0, %v2082
        %v2084 = vpop.f32.mrb[0].mxu0
        %2085 = vmatprep.mubr.f32.mxu0 0.0
        %2086 = vmatmul.mubr.f32.gmra.mrb[0].mxu0 %v2014
        %v2087 = vpop.f32.mrb[0].mxu0
        %v2088 = vadd.f32 0.0, %v2087
        %v2089 = vpop.f32.mrb[0].mxu0
        %2090 = vdwg.mxu0
        %v2091 = vmul.f32 %v2083, %v2083
        %v2092 = vmul.f32 %v2088, %v2088
        %v2093 = vsel %vm907, %v2091, 0.0
        %2094 = vadd.xlane.f32.xlu0 %v2093
        %v2095 = vpop.xlane.xlu0 %2094
        %v2096 = vsel %vm907, %v2092, 0.0
        %2097 = vadd.xlane.f32.xlu0 %v2096
        %v2098 = vpop.xlane.xlu0 %2097
        %v2099 = vmul.f32 %v2095, %v1976
        %v2100 = vmul.f32 %v2098, %v1976
        %v2101 = vadd.f32 %v2099, 1e-05
        %v2102 = vadd.f32 %v2100, 1e-05
        %v2103 = vrsqrt.pop %v2101
        %v2104 = vrsqrt.pop %v2102
        %v2105 = vmul.f32 %v2083, %v2103
        %v2106 = vmul.f32 %v2088, %v2104
        %v2107 = vmul.f32 %v2105, %v1990
        %v2108 = vmul.f32 %v2106, %v1990
        %2111 = vrot.lane.b32.xlu0 %v2107, 16
        %v2112 = vpop.permute.xlu0 %2111
        %2113 = vrot.lane.b32.xlu0 %v2108, 16
        %v2114 = vpop.permute.xlu0 %2113
        %v2117 = vsel %vm907, %v1992, %v2112
        %v2118 = vsel %vm907, %v1993, %v2114
        %v2119 = vpack.c.bf16 %v2118, %v2117
        %v2120 = vld [vmem:[%s6] sm:$0xf]
        %v2121 = vld [vmem:[%s6 + $0x4] sm:$0xf]
        %v2122 = vld [vmem:[%s6 + $0x8] sm:$0xf]
        %v2123 = vld [vmem:[%s6 + $0xc] sm:$0xf]
        %v2128 = vunpack.c.l.b16 %v2120
        %v2129 = vunpack.c.l.b16 %v2121
        %v2130 = vunpack.c.l.b16 %v2122
        %v2131 = vunpack.c.l.b16 %v2123
        %v2132 = vpack.c.b16 %v2129, %v2128
        %v2133 = vpack.c.b16 %v2131, %v2130
        %v2137 = vsel %vm452, %v2119, 0
        %2139 = vmatprep.subr.bf16.mxu0 0
        %2140 = vmatpush1.bf16.msra.mxu0 %v2132
        %2141 = vmatprep.subr.bf16.mxu0 0
        %2142 = vmatpush1.bf16.msra.mxu0 %v2133
        %2143 = vmatprep.subr.bf16.mxu0 0
        %2144 = vmatpush1.bf16.msra.mxu0 0
        %2145 = vmatprep.subr.bf16.mxu0 0
        %2146 = vmatpush1.bf16.msra.mxu0 0
        %2147 = vmatprep.subr.bf16.mxu0 0
        %2148 = vmatpush1.bf16.msra.mxu0 0
        %2149 = vmatprep.subr.bf16.mxu0 0
        %2150 = vmatpush1.bf16.msra.mxu0 0
        %2151 = vmatprep.subr.bf16.mxu0 0
        %2152 = vmatpush1.bf16.msra.mxu0 0
        %2153 = vmatprep.subr.bf16.mxu0 0
        %2154 = vmatpush1.bf16.msra.mxu0 0
        %2155 = vmatprep.subr.bf16.mxu0 0
        %2156 = vmatpush1.bf16.msra.mxu0 0
        %2157 = vmatprep.subr.bf16.mxu0 0
        %2158 = vmatpush1.bf16.msra.mxu0 0
        %2159 = vmatprep.subr.bf16.mxu0 0
        %2160 = vmatpush1.bf16.msra.mxu0 0
        %2161 = vmatprep.subr.bf16.mxu0 0
        %2162 = vmatpush1.bf16.msra.mxu0 0
        %2163 = vmatprep.subr.bf16.mxu0 0
        %2164 = vmatpush1.bf16.msra.mxu0 0
        %2165 = vmatprep.subr.bf16.mxu0 0
        %2166 = vmatpush1.bf16.msra.mxu0 0
        %2167 = vmatprep.subr.bf16.mxu0 0
        %2168 = vmatpush1.bf16.msra.mxu0 0
        %2169 = vmatprep.subr.bf16.mxu0 0
        %2170 = vmatpush1.bf16.msra.mxu0 0
        %2171 = vmatprep.mubr.bf16.mxu0 0
        %2172 = vmatmul.mubr.bf16.gmra.mrb[0].mxu0 %v2137
        %v2173 = vpop.f32.mrb[0].mxu0
        %v2174 = vadd.f32 0.0, %v2173
        %v2175 = vpop.f32.mrb[0].mxu0
        %v2176 = vpop.f32.mrb[0].mxu0
        %v2177 = vadd.f32 0.0, %v2176
        %v2178 = vpop.f32.mrb[0].mxu0
        %2179 = vdwg.mxu0
        %v2181 = vrot.slane %v2174, 4
        %2182 = vrot.lane.b32.xlu0 %v2181, 32
        %v2183 = vpop.permute.xlu0 %2182
        %2186 = vrot.lane.b32.xlu0 %v2177, 64
        %v2187 = vpop.permute.xlu0 %2186
        %v2189 = vrot.slane %v2177, 4
        %2190 = vrot.lane.b32.xlu0 %v2189, 96
        %v2191 = vpop.permute.xlu0 %2190
        %v2193 = vsel %vm452, %v2174, %v2183
        %vm2194 = vcmask 523264
        %v2195 = vsel %vm2194, %v2193, %v2187
        %vm2196 = vcmask 785408
        %v2197 = vsel %vm2196, %v2195, %v2191
        %2198 = vst [vmem:[%s425] sm:$0xf] %v2197
        %p2199 = scmp.lt.s32.totalorder %s22, 1
        %s2200 = scalar_select %p2199, %s22, 1
        %s2201 = smul.addr %s2200, 4
        %s2202 = scalar_lea.vmem %s10, %s2201
        // Predicated region
        $region65: #{attention_forward.1} parent=59 // pred_check
          %p2203 = pneg %p270
        $region66: #{attention_forward.1} parent=59 // pred_check_branch
          %2205 = sbr.rel (%p2203) target = $region68
        $region67: #{attention_forward.1} parent=59 // pred_region
          _
        $region68: #{attention_forward.1} parent=59 // pred_fallthru
          _
      $region60: #{attention_forward.1} parent=5 // pred_fallthru
        _
      %p2206 = scmp.le.s32.totalorder 2, %s17
      // Predicated region
      $region69: #{attention_forward.1} parent=5 // pred_check
        %p2207 = pneg %p2206
      $region70: #{attention_forward.1} parent=5 // pred_check_branch
        %2209 = sbr.rel (%p2207) target = $region72
      $region71: #{attention_forward.1} parent=5 // pred_region
        %s2210 = ssub.s32 %s17, 2
        // Predicated region
        $region73: #{attention_forward.1} parent=71 // pred_check
          %p2211 = pneg %p276
        $region74: #{attention_forward.1} parent=71 // pred_check_branch
          %2213 = sbr.rel (%p2211) target = $region76
        $region75: #{attention_forward.1} parent=71 // pred_region
          %p2214 = scmp.lt.s32.totalorder %s23, 1
          %s2215 = scalar_select %p2214, %s23, 1
          %s2216 = smul.addr %s2215, 4
          %s2217 = scalar_lea.vmem %s10, %s2216
        $region76: #{attention_forward.1} parent=71 // pred_fallthru
          _
      $region72: #{attention_forward.1} parent=5 // pred_fallthru
        _
    $region6: #{attention_forward.1} parent=1 // loop_footer
      %s21 = sadd.s32 1, %s17
    $region7: #{attention_forward.1} parent=1 // loop_footer_branch
      %16 = sbr.rel target = $region3
    $region8: #{attention_forward.1} parent=1 // loop_exit
      _
    %2218 = vsyncpa [#allocation3], 1
    %s2219 = scalar_lea.sflag [#allocation3], 1
    %2220 = vsyncpa %s2219, 1

</llo_original>
